<compile_context>
chip_gen: v7x
topology: tpu7x:2x2x1
jax: 0.10.0
libtpu: 0.0.40
codegen_flags: <defaults>
</compile_context>

<pallas_src>
import jax
import jax.numpy as jnp
from jax.experimental import pallas as pl
from jax.experimental.pallas import tpu as pltpu


def mlp_kernel(x_ref, w1_ref, b1_ref, w2_ref, b2_ref, o_ref):
    # layer1: x @ W1 + b1 (MXU matmul, f32 accumulation), ReLU in f32.
    h = jnp.dot(x_ref[...], w1_ref[...], preferred_element_type=jnp.float32)
    h = jnp.maximum(h + b1_ref[...], 0.0)
    # Single cast in the hot path only when the compute dtype is sub-32-bit (bf16 path);
    # for f32 this is a trace-time no-op.
    if h.dtype != w2_ref.dtype:
        h = h.astype(w2_ref.dtype)
    # layer2: h @ W2 + b2
    y = jnp.dot(h, w2_ref[...], preferred_element_type=jnp.float32)
    o_ref[...] = (y + b2_ref[...]).astype(o_ref.dtype)


def _round_up(x, m):
    return ((x + m - 1) // m) * m


def prepare_params(w1, b1, w2, b2, *, compute_dtype=None):
    """One-time (hoisted) weight prep: pad hidden dim to a lane-dense multiple of 128
    and cast weights to the compute dtype. Padded rows/columns are zero, so the math
    is unchanged. Call once at parameter-load time, NOT per forward."""
    cdt = w1.dtype if compute_dtype is None else compute_dtype
    F, H = w1.shape
    T = w2.shape[1]
    Hp = _round_up(H, 128)
    w1p = jnp.zeros((F, Hp), cdt).at[:, :H].set(w1.astype(cdt))
    b1p = jnp.zeros((1, Hp), jnp.float32).at[:, :H].set(b1.astype(jnp.float32))
    w2p = jnp.zeros((Hp, T), cdt).at[:H, :].set(w2.astype(cdt))
    b2p = b2.astype(jnp.float32).reshape(1, T)
    return w1p, b1p, w2p, b2p


def _choose_batch_tile(B, block_batch, align, min_grid_steps):
    tb = min(block_batch, _round_up(B, align))
    steps = -(-B // tb)
    # Keep >= min_grid_steps grid steps when the batch allows it so the "parallel"
    # batch axis can be sharded across v7x's two TensorCores (v5e/v6e: harmless).
    if steps < min_grid_steps and B > min_grid_steps * align:
        tb = _round_up(-(-B // min_grid_steps), align)
    return tb


def _forward(x, params, *, block_batch, min_grid_steps, out_dtype, single_buffer_weights):
    w1p, b1p, w2p, b2p = params
    B, F = x.shape
    Fw, Hp = w1p.shape
    T = w2p.shape[1]
    assert F == Fw, "x feature dim must match prepared W1"
    cdt = w1p.dtype
    out_dtype = x.dtype if out_dtype is None else out_dtype
    if x.dtype != cdt:
        x = x.astype(cdt)

    isz = jnp.dtype(cdt).itemsize
    osz = jnp.dtype(out_dtype).itemsize
    # Sub-32-bit dtypes pack along sublanes: keep the batch tile a multiple of 16 (bf16)
    # or 32 (int8/fp8); f32 only needs 8.
    align = 8 if isz >= 4 else (16 if isz == 2 else 32)

    tb = _choose_batch_tile(B, block_batch, align, min_grid_steps)
    grid = (-(-B // tb),)  # ceil-div; Pallas masks the ragged last block's OOB rows

    # VMEM budget: streamed x/out tiles (double-buffered), resident weights/biases
    # (single- or double-buffered), the f32 hidden activation, epilogue temporaries
    # and Mosaic internal-scratch headroom.
    w_bufs = 1 if single_buffer_weights else 2
    vmem_bytes = (
        2 * tb * F * isz                       # x tiles (double-buffered)
        + w_bufs * (F * Hp + Hp * T) * isz     # resident weights
        + w_bufs * (Hp + T) * 4                # resident biases (f32)
        + 2 * tb * T * osz                     # output tiles (double-buffered)
        + tb * Hp * 4                          # hidden activation h (f32)
        + tb * max(Hp, T) * 4                  # matmul result / epilogue temporaries
        + (2 << 20)                            # internal scratch headroom
    )
    try:
        vmem_cap = int(pltpu.get_tpu_info().vmem_capacity_bytes)
    except Exception:
        vmem_cap = 64 << 20  # conservative (v7x per-TC physical VMEM)
    vmem_limit = int(min(max(vmem_bytes, 16 << 20), (vmem_cap * 3) // 4))
    # TODO(synk): add a K-reduction grid axis (accumulator + pl.when init/finalize) for
    # weight sets that exceed the resident-VMEM budget (matters on v7x's 64 MiB VMEM);
    # unnecessary at these sizes.

    cost = pl.CostEstimate(
        flops=2 * B * (F * Hp + Hp * T),
        transcendentals=0,
        bytes_accessed=(B * F + F * Hp + Hp * T) * isz + (Hp + T) * 4 + B * T * osz,
    )

    # Resident operands never change block index -> request single buffering.
    weight_mode = dict(pipeline_mode=pl.Buffered(1)) if single_buffer_weights else {}
    in_specs = [
        pl.BlockSpec((tb, F), lambda i: (i, 0)),                 # x: streamed over batch
        pl.BlockSpec((F, Hp), lambda i: (0, 0), **weight_mode),  # W1: resident
        pl.BlockSpec((1, Hp), lambda i: (0, 0), **weight_mode),  # b1: resident
        pl.BlockSpec((Hp, T), lambda i: (0, 0), **weight_mode),  # W2: resident
        pl.BlockSpec((1, T), lambda i: (0, 0), **weight_mode),   # b2: resident
    ]
    out_specs = pl.BlockSpec((tb, T), lambda i: (i, 0))           # unpadded (B, T) output

    return pl.pallas_call(
        mlp_kernel,
        out_shape=jax.ShapeDtypeStruct((B, T), out_dtype),
        grid=grid,
        in_specs=in_specs,
        out_specs=out_specs,
        compiler_params=pltpu.CompilerParams(
            dimension_semantics=("parallel",),
            vmem_limit_bytes=vmem_limit,
        ),
        cost_estimate=cost,
    )(x, w1p, b1p, w2p, b2p)


def two_layer_network(x, params, *, block_batch=512, min_grid_steps=2, out_dtype=None):
    """Forward pass of TwoLayerNetwork.

    x: (B, F); params = prepare_params(w1, b1, w2, b2) with
    w1 (F, H), b1 (1, H), w2 (H, T), b2 (1, T). Returns (B, T).
    """
    try:
        return _forward(x, params, block_batch=block_batch, min_grid_steps=min_grid_steps,
                        out_dtype=out_dtype, single_buffer_weights=True)
    except Exception:
        # Fallback: some jax builds may reject pipeline_mode=pl.Buffered(1); retry with
        # default double-buffered weights (costs one extra weight copy of VMEM only).
        return _forward(x, params, block_batch=block_batch, min_grid_steps=min_grid_steps,
                        out_dtype=out_dtype, single_buffer_weights=False)


def init_params(key, num_features, num_hidden, num_targets, dtype=jnp.float32):
    """Deterministic init mimicking PyTorch Linear default U[-1/sqrt(fan_in), +1/sqrt(fan_in)]."""
    k1, k2, k3, k4 = jax.random.split(key, 4)
    bound1 = 1.0 / jnp.sqrt(num_features)
    bound2 = 1.0 / jnp.sqrt(num_hidden)
    w1 = jax.random.uniform(k1, (num_features, num_hidden), dtype, -bound1, bound1)
    b1 = jax.random.uniform(k2, (1, num_hidden), dtype, -bound1, bound1)
    w2 = jax.random.uniform(k3, (num_hidden, num_targets), dtype, -bound2, bound2)
    b2 = jax.random.uniform(k4, (1, num_targets), dtype, -bound2, bound2)
    return w1, b1, w2, b2


if __name__ == "__main__":
    num_features, num_hidden, num_targets = 16, 32, 4
    batch = 256  # > one batch tile so the batch grid / pipelining / megacore split is exercised

    key = jax.random.PRNGKey(0)
    kx, kp = jax.random.split(key)
    x = jax.random.normal(kx, (batch, num_features), jnp.float32)
    w1, b1, w2, b2 = init_params(kp, num_features, num_hidden, num_targets)

    # Hoisted, one-time weight prep (pad hidden dim to 128 lanes, cast). For real sizes
    # on v6e/v7x pass compute_dtype=jnp.bfloat16 here; the demo keeps f32 for the check.
    params = prepare_params(w1, b1, w2, b2)

    out = two_layer_network(x, params, block_batch=512)
    out = jax.block_until_ready(out)

    # Reference check in plain JAX (same math as the PyTorch module).
    ref = jnp.maximum(x @ w1 + b1, 0.0) @ w2 + b2
    assert out.shape == (batch, num_targets)
    assert jnp.allclose(out, ref, atol=1e-5, rtol=1e-5)
    print("KERNEL_OK")
</pallas_src>

<mosaic_0001>
module attributes {stable_mosaic.version = 11 : i64} {
  func.func @mlp_kernel(%arg0: i32, %arg1: memref<128x16xf32, #tpu.memory_space<vmem>>, %arg2: memref<16x128xf32, #tpu.memory_space<vmem>>, %arg3: memref<1x128xf32, #tpu.memory_space<vmem>>, %arg4: memref<128x4xf32, #tpu.memory_space<vmem>>, %arg5: memref<1x4xf32, #tpu.memory_space<vmem>>, %arg6: memref<128x4xf32, #tpu.memory_space<vmem>>) attributes {dimension_semantics = [#tpu.dimension_semantics<parallel>], iteration_bounds = array<i64: 2>, scalar_prefetch = 0 : i64, scratch_operands = 0 : i64, tpu.core_type = #tpu.core_type<tc>, window_params = [{transform_indices = @transform_0, window_bounds = array<i64: 128, 16>}, {pipeline_mode = #tpu.pipeline_mode<synchronous>, transform_indices = @transform_1, window_bounds = array<i64: 16, 128>}, {pipeline_mode = #tpu.pipeline_mode<synchronous>, transform_indices = @transform_2, window_bounds = array<i64: 1, 128>}, {pipeline_mode = #tpu.pipeline_mode<synchronous>, transform_indices = @transform_3, window_bounds = array<i64: 128, 4>}, {pipeline_mode = #tpu.pipeline_mode<synchronous>, transform_indices = @transform_4, window_bounds = array<i64: 1, 4>}, {transform_indices = @transform_5, window_bounds = array<i64: 128, 4>}]} {
    %c0 = arith.constant 0 : index
    %c0_0 = arith.constant 0 : index
    %0 = vector.load %arg1[%c0, %c0_0] : memref<128x16xf32, #tpu.memory_space<vmem>>, vector<128x16xf32>
    %c0_1 = arith.constant 0 : index
    %c0_2 = arith.constant 0 : index
    %1 = vector.load %arg2[%c0_1, %c0_2] : memref<16x128xf32, #tpu.memory_space<vmem>>, vector<16x128xf32>
    %cst = arith.constant dense<0.000000e+00> : vector<128x128xf32>
    %2 = tpu.matmul %0, %1, %cst {dimension_numbers = #tpu.dot_dimension_numbers<[1], [0], [0], [1], [0, 0, 1, 1], [], []>} : vector<128x16xf32>, vector<16x128xf32>, vector<128x128xf32> -> vector<128x128xf32>
    %c0_3 = arith.constant 0 : index
    %c0_4 = arith.constant 0 : index
    %3 = vector.load %arg3[%c0_3, %c0_4] : memref<1x128xf32, #tpu.memory_space<vmem>>, vector<1x128xf32>
    %4 = vector.broadcast %3 : vector<1x128xf32> to vector<128x128xf32>
    %5 = arith.addf %2, %4 : vector<128x128xf32>
    %cst_5 = arith.constant 0.000000e+00 : f32
    %6 = vector.broadcast %cst_5 : f32 to vector<128x128xf32>
    %7 = arith.maximumf %5, %6 : vector<128x128xf32>
    %c0_6 = arith.constant 0 : index
    %c0_7 = arith.constant 0 : index
    %8 = vector.load %arg4[%c0_6, %c0_7] : memref<128x4xf32, #tpu.memory_space<vmem>>, vector<128x4xf32>
    %cst_8 = arith.constant dense<0.000000e+00> : vector<128x4xf32>
    %9 = tpu.matmul %7, %8, %cst_8 {dimension_numbers = #tpu.dot_dimension_numbers<[1], [0], [0], [1], [0, 0, 1, 1], [], []>} : vector<128x128xf32>, vector<128x4xf32>, vector<128x4xf32> -> vector<128x4xf32>
    %c0_9 = arith.constant 0 : index
    %c0_10 = arith.constant 0 : index
    %10 = vector.load %arg5[%c0_9, %c0_10] : memref<1x4xf32, #tpu.memory_space<vmem>>, vector<1x4xf32>
    %11 = vector.broadcast %10 : vector<1x4xf32> to vector<128x4xf32>
    %12 = arith.addf %9, %11 : vector<128x4xf32>
    %c0_11 = arith.constant 0 : index
    %c0_12 = arith.constant 0 : index
    %13 = vector.load %arg6[%c0_11, %c0_12] : memref<128x4xf32, #tpu.memory_space<vmem>>, vector<128x4xf32>
    tpu.vector_store %arg6[%c0_11, %c0_12], %12 {strides = array<i32>} : memref<128x4xf32, #tpu.memory_space<vmem>>, vector<128x4xf32>,
    return
  }
  func.func @transform_0(%arg0: i32) -> (i32, i32) {
    %c0_i32 = arith.constant 0 : i32
    %c0_i32_0 = arith.constant 0 : i32
    return %arg0, %c0_i32 : i32, i32
  }
  func.func @transform_1(%arg0: i32) -> (i32, i32) {
    %c0_i32 = arith.constant 0 : i32
    %c0_i32_0 = arith.constant 0 : i32
    %c0_i32_1 = arith.constant 0 : i32
    return %c0_i32, %c0_i32_0 : i32, i32
  }
  func.func @transform_2(%arg0: i32) -> (i32, i32) {
    %c0_i32 = arith.constant 0 : i32
    %c0_i32_0 = arith.constant 0 : i32
    %c0_i32_1 = arith.constant 0 : i32
    return %c0_i32, %c0_i32_0 : i32, i32
  }
  func.func @transform_3(%arg0: i32) -> (i32, i32) {
    %c0_i32 = arith.constant 0 : i32
    %c0_i32_0 = arith.constant 0 : i32
    %c0_i32_1 = arith.constant 0 : i32
    return %c0_i32, %c0_i32_0 : i32, i32
  }
  func.func @transform_4(%arg0: i32) -> (i32, i32) {
    %c0_i32 = arith.constant 0 : i32
    %c0_i32_0 = arith.constant 0 : i32
    %c0_i32_1 = arith.constant 0 : i32
    return %c0_i32, %c0_i32_0 : i32, i32
  }
  func.func @transform_5(%arg0: i32) -> (i32, i32) {
    %c0_i32 = arith.constant 0 : i32
    %c0_i32_0 = arith.constant 0 : i32
    return %arg0, %c0_i32 : i32, i32
  }
}

module attributes {stable_mosaic.version = 11 : i64} {
  func.func @mlp_kernel(%arg0: i32, %arg1: memref<128x16xf32, #tpu.memory_space<vmem>>, %arg2: memref<16x128xf32, #tpu.memory_space<vmem>>, %arg3: memref<1x128xf32, #tpu.memory_space<vmem>>, %arg4: memref<128x4xf32, #tpu.memory_space<vmem>>, %arg5: memref<1x4xf32, #tpu.memory_space<vmem>>, %arg6: memref<128x4xf32, #tpu.memory_space<vmem>>) attributes {dimension_semantics = [#tpu.dimension_semantics<parallel>], iteration_bounds = array<i64: 2>, scalar_prefetch = 0 : i64, scratch_operands = 0 : i64, tpu.core_type = #tpu.core_type<tc>, window_params = [{transform_indices = @transform_0, window_bounds = array<i64: 128, 16>}, {pipeline_mode = #tpu.pipeline_mode<synchronous>, transform_indices = @transform_1, window_bounds = array<i64: 16, 128>}, {pipeline_mode = #tpu.pipeline_mode<synchronous>, transform_indices = @transform_2, window_bounds = array<i64: 1, 128>}, {pipeline_mode = #tpu.pipeline_mode<synchronous>, transform_indices = @transform_3, window_bounds = array<i64: 128, 4>}, {pipeline_mode = #tpu.pipeline_mode<synchronous>, transform_indices = @transform_4, window_bounds = array<i64: 1, 4>}, {transform_indices = @transform_5, window_bounds = array<i64: 128, 4>}]} {
    %c0 = arith.constant 0 : index
    %c0_0 = arith.constant 0 : index
    %0 = vector.load %arg1[%c0, %c0_0] : memref<128x16xf32, #tpu.memory_space<vmem>>, vector<128x16xf32>
    %c0_1 = arith.constant 0 : index
    %c0_2 = arith.constant 0 : index
    %1 = vector.load %arg2[%c0_1, %c0_2] : memref<16x128xf32, #tpu.memory_space<vmem>>, vector<16x128xf32>
    %cst = arith.constant dense<0.000000e+00> : vector<128x128xf32>
    %2 = tpu.matmul %0, %1, %cst {dimension_numbers = #tpu.dot_dimension_numbers<[1], [0], [0], [1], [0, 0, 1, 1], [], []>} : vector<128x16xf32>, vector<16x128xf32>, vector<128x128xf32> -> vector<128x128xf32>
    %c0_3 = arith.constant 0 : index
    %c0_4 = arith.constant 0 : index
    %3 = vector.load %arg3[%c0_3, %c0_4] : memref<1x128xf32, #tpu.memory_space<vmem>>, vector<1x128xf32>
    %4 = vector.broadcast %3 : vector<1x128xf32> to vector<128x128xf32>
    %5 = arith.addf %2, %4 : vector<128x128xf32>
    %cst_5 = arith.constant 0.000000e+00 : f32
    %6 = vector.broadcast %cst_5 : f32 to vector<128x128xf32>
    %7 = arith.maximumf %5, %6 : vector<128x128xf32>
    %c0_6 = arith.constant 0 : index
    %c0_7 = arith.constant 0 : index
    %8 = vector.load %arg4[%c0_6, %c0_7] : memref<128x4xf32, #tpu.memory_space<vmem>>, vector<128x4xf32>
    %cst_8 = arith.constant dense<0.000000e+00> : vector<128x4xf32>
    %9 = tpu.matmul %7, %8, %cst_8 {dimension_numbers = #tpu.dot_dimension_numbers<[1], [0], [0], [1], [0, 0, 1, 1], [], []>} : vector<128x128xf32>, vector<128x4xf32>, vector<128x4xf32> -> vector<128x4xf32>
    %c0_9 = arith.constant 0 : index
    %c0_10 = arith.constant 0 : index
    %10 = vector.load %arg5[%c0_9, %c0_10] : memref<1x4xf32, #tpu.memory_space<vmem>>, vector<1x4xf32>
    %11 = vector.broadcast %10 : vector<1x4xf32> to vector<128x4xf32>
    %12 = arith.addf %9, %11 : vector<128x4xf32>
    %c0_11 = arith.constant 0 : index
    %c0_12 = arith.constant 0 : index
    %13 = vector.load %arg6[%c0_11, %c0_12] : memref<128x4xf32, #tpu.memory_space<vmem>>, vector<128x4xf32>
    tpu.vector_store %arg6[%c0_11, %c0_12], %12 {strides = array<i32>} : memref<128x4xf32, #tpu.memory_space<vmem>>, vector<128x4xf32>,
    return
  }
  func.func @transform_0(%arg0: i32) -> (i32, i32) {
    %c0_i32 = arith.constant 0 : i32
    %c0_i32_0 = arith.constant 0 : i32
    return %arg0, %c0_i32 : i32, i32
  }
  func.func @transform_1(%arg0: i32) -> (i32, i32) {
    %c0_i32 = arith.constant 0 : i32
    %c0_i32_0 = arith.constant 0 : i32
    %c0_i32_1 = arith.constant 0 : i32
    return %c0_i32, %c0_i32_0 : i32, i32
  }
  func.func @transform_2(%arg0: i32) -> (i32, i32) {
    %c0_i32 = arith.constant 0 : i32
    %c0_i32_0 = arith.constant 0 : i32
    %c0_i32_1 = arith.constant 0 : i32
    return %c0_i32, %c0_i32_0 : i32, i32
  }
  func.func @transform_3(%arg0: i32) -> (i32, i32) {
    %c0_i32 = arith.constant 0 : i32
    %c0_i32_0 = arith.constant 0 : i32
    %c0_i32_1 = arith.constant 0 : i32
    return %c0_i32, %c0_i32_0 : i32, i32
  }
  func.func @transform_4(%arg0: i32) -> (i32, i32) {
    %c0_i32 = arith.constant 0 : i32
    %c0_i32_0 = arith.constant 0 : i32
    %c0_i32_1 = arith.constant 0 : i32
    return %c0_i32, %c0_i32_0 : i32, i32
  }
  func.func @transform_5(%arg0: i32) -> (i32, i32) {
    %c0_i32 = arith.constant 0 : i32
    %c0_i32_0 = arith.constant 0 : i32
    return %arg0, %c0_i32 : i32, i32
  }
}

</mosaic_0001>

<llo_original>
// kernel: tpu_custom_call.1
$region0: #{tpu_custom_call.1}
  #allocation0 [shape = 'u32[]', space=smem, size = 0x4, offset = 0x4, fixed_abs, tag = 'smem constant byte address 0x4 - core index']
  #allocation1 [shape = 'u32[144,128]{1,0:T(1,128)}', space=vmem, size = 0x12000, scoped, tag = 'internal scratch']
  %s0 = inlined_call_operand.vmem [shape: f32[256,16], index: 0, kind: input, shape index: {}]
  %s1 = inlined_call_operand.vmem [shape: f32[16,128], index: 1, kind: input, shape index: {}]
  %s2 = inlined_call_operand.vmem [shape: f32[1,128], index: 2, kind: input, shape index: {}]
  %s3 = inlined_call_operand.vmem [shape: f32[128,4], index: 3, kind: input, shape index: {}]
  %s4 = inlined_call_operand.vmem [shape: f32[1,4], index: 4, kind: input, shape index: {}]
  %s5 = inlined_call_operand.vmem [shape: f32[256,4], index: 5, kind: output, shape index: {}]
  %s6 = sld [smem:[#allocation0]]
  $region53: #{tpu_custom_call.1} parent=0
    _
  %s8 = ssub.s32 1, %s6
  %s9 = scalar_select 0, %s8, %s6
  loop: start=0, step=1, limit=4
  $region2: #{tpu_custom_call.1} parent=0 // loop_pre_header
    _
  $region3: #{tpu_custom_call.1} parent=0 // loop_header
    %s11 = sphi 0, %s15
    %p12 = scmp.ge.s32.totalorder %s11, 4
    %s21 = sphi 0, %s23
    %s24 = sphi 0, %s21
    %s25 = sphi 0, %s24
    %s41 = sphi 0, %s25
    %s45 = sphi 0, %s45
    %s47 = sphi 0, %s45
    %s48 = sphi 0, %s47
    %s62 = sphi 0, %s48
    %s66 = sphi 0, %s66
    %s68 = sphi 0, %s66
    %s69 = sphi 0, %s68
    %s83 = sphi 0, %s69
    %s87 = sphi 0, %s87
    %s89 = sphi 0, %s87
    %s90 = sphi 0, %s89
    %s104 = sphi 0, %s90
    %s108 = sphi 0, %s108
    %s110 = sphi 0, %s108
    %s111 = sphi 0, %s110
    %s125 = sphi 0, %s111
    %s131 = sphi 0, %s133
    %s134 = sphi 0, %s131
    %s135 = sphi 0, %s134
    %s151 = sphi 0, %s135
  $region4: #{tpu_custom_call.1} parent=0 // loop_header_branch
    %14 = sbr.rel (%p12) target = $region8
  $region5: #{tpu_custom_call.1} parent=0 // loop_body
    %s16 = ssub.s32 %s11, 1
    %s17 = ssub.s32 %s11, 2
    %s18 = sadd.s32 %s11, 1
    %s19 = ssub.s32 %s11, %s18
    %p20 = scmp.eq.s32.totalorder %s19, 0
    %s22 = sadd.s32 %s21, 1
    %s23 = scalar_select %p20, %s21, %s22
    %p26 = pneg %p20
    %p27 = scmp.eq.s32.totalorder %s11, 1
    %p28 = por %p26, %p27
    %p29 = scmp.ne.s32.totalorder %s21, %s24
    %p30 = scmp.eq.s32.totalorder %s11, 0
    %p31 = por %p29, %p30
    %p32 = scmp.ne.s32.totalorder %s21, %s24
    %p33 = scmp.eq.s32.totalorder %s16, 1
    %p34 = por %p32, %p33
    %p35 = scmp.ne.s32.totalorder %s24, %s25
    %p36 = scmp.eq.s32.totalorder %s16, 0
    %p37 = por %p35, %p36
    %p38 = scmp.ne.s32.totalorder %s24, %s25
    %p39 = scmp.eq.s32.totalorder %s17, 1
    %p40 = por %p38, %p39
    %p42 = scmp.ne.s32.totalorder %s25, %s41
    %p43 = scmp.eq.s32.totalorder %s17, 0
    %p44 = por %p42, %p43
    %s46 = sadd.s32 %s45, 1
    %p49 = scmp.eq.s32.totalorder %s11, 1
    %p50 = scmp.ne.s32.totalorder %s45, %s47
    %p51 = scmp.eq.s32.totalorder %s11, 0
    %p52 = por %p50, %p51
    %p53 = scmp.ne.s32.totalorder %s45, %s47
    %p54 = scmp.eq.s32.totalorder %s16, 1
    %p55 = por %p53, %p54
    %p56 = scmp.ne.s32.totalorder %s47, %s48
    %p57 = scmp.eq.s32.totalorder %s16, 0
    %p58 = por %p56, %p57
    %p59 = scmp.ne.s32.totalorder %s47, %s48
    %p60 = scmp.eq.s32.totalorder %s17, 1
    %p61 = por %p59, %p60
    %p63 = scmp.ne.s32.totalorder %s48, %s62
    %p64 = scmp.eq.s32.totalorder %s17, 0
    %p65 = por %p63, %p64
    %s67 = sadd.s32 %s66, 1
    %p70 = scmp.eq.s32.totalorder %s11, 1
    %p71 = scmp.ne.s32.totalorder %s66, %s68
    %p72 = scmp.eq.s32.totalorder %s11, 0
    %p73 = por %p71, %p72
    %p74 = scmp.ne.s32.totalorder %s66, %s68
    %p75 = scmp.eq.s32.totalorder %s16, 1
    %p76 = por %p74, %p75
    %p77 = scmp.ne.s32.totalorder %s68, %s69
    %p78 = scmp.eq.s32.totalorder %s16, 0
    %p79 = por %p77, %p78
    %p80 = scmp.ne.s32.totalorder %s68, %s69
    %p81 = scmp.eq.s32.totalorder %s17, 1
    %p82 = por %p80, %p81
    %p84 = scmp.ne.s32.totalorder %s69, %s83
    %p85 = scmp.eq.s32.totalorder %s17, 0
    %p86 = por %p84, %p85
    %s88 = sadd.s32 %s87, 1
    %p91 = scmp.eq.s32.totalorder %s11, 1
    %p92 = scmp.ne.s32.totalorder %s87, %s89
    %p93 = scmp.eq.s32.totalorder %s11, 0
    %p94 = por %p92, %p93
    %p95 = scmp.ne.s32.totalorder %s87, %s89
    %p96 = scmp.eq.s32.totalorder %s16, 1
    %p97 = por %p95, %p96
    %p98 = scmp.ne.s32.totalorder %s89, %s90
    %p99 = scmp.eq.s32.totalorder %s16, 0
    %p100 = por %p98, %p99
    %p101 = scmp.ne.s32.totalorder %s89, %s90
    %p102 = scmp.eq.s32.totalorder %s17, 1
    %p103 = por %p101, %p102
    %p105 = scmp.ne.s32.totalorder %s90, %s104
    %p106 = scmp.eq.s32.totalorder %s17, 0
    %p107 = por %p105, %p106
    %s109 = sadd.s32 %s108, 1
    %p112 = scmp.eq.s32.totalorder %s11, 1
    %p113 = scmp.ne.s32.totalorder %s108, %s110
    %p114 = scmp.eq.s32.totalorder %s11, 0
    %p115 = por %p113, %p114
    %p116 = scmp.ne.s32.totalorder %s108, %s110
    %p117 = scmp.eq.s32.totalorder %s16, 1
    %p118 = por %p116, %p117
    %p119 = scmp.ne.s32.totalorder %s110, %s111
    %p120 = scmp.eq.s32.totalorder %s16, 0
    %p121 = por %p119, %p120
    %p122 = scmp.ne.s32.totalorder %s110, %s111
    %p123 = scmp.eq.s32.totalorder %s17, 1
    %p124 = por %p122, %p123
    %p126 = scmp.ne.s32.totalorder %s111, %s125
    %p127 = scmp.eq.s32.totalorder %s17, 0
    %p128 = por %p126, %p127
    %s129 = ssub.s32 %s11, %s18
    %p130 = scmp.eq.s32.totalorder %s129, 0
    %s132 = sadd.s32 %s131, 1
    %s133 = scalar_select %p130, %s131, %s132
    %p136 = pneg %p130
    %p137 = scmp.eq.s32.totalorder %s11, 1
    %p138 = por %p136, %p137
    %p139 = scmp.ne.s32.totalorder %s131, %s134
    %p140 = scmp.eq.s32.totalorder %s11, 0
    %p141 = por %p139, %p140
    %p142 = scmp.ne.s32.totalorder %s131, %s134
    %p143 = scmp.eq.s32.totalorder %s16, 1
    %p144 = por %p142, %p143
    %p145 = scmp.ne.s32.totalorder %s134, %s135
    %p146 = scmp.eq.s32.totalorder %s16, 0
    %p147 = por %p145, %p146
    %p148 = scmp.ne.s32.totalorder %s134, %s135
    %p149 = scmp.eq.s32.totalorder %s17, 1
    %p150 = por %p148, %p149
    %p152 = scmp.ne.s32.totalorder %s135, %s151
    %p153 = scmp.eq.s32.totalorder %s17, 0
    %p154 = por %p152, %p153
    %p155 = scmp.le.s32.totalorder 1, %s11
    %p156 = scmp.lt.s32.totalorder %s11, 3
    %p157 = pnand %p155, %p156
    %p158 = pneg %p157
    // Predicated region
    $region9: #{tpu_custom_call.1} parent=5 // pred_check
      _
    $region10: #{tpu_custom_call.1} parent=5 // pred_check_branch
      %160 = sbr.rel (%p157) target = $region12
    $region11: #{tpu_custom_call.1} parent=5 // pred_region
      %s161 = ssub.s32 %s11, 1
      // Predicated region
      $region13: #{tpu_custom_call.1} parent=11 // pred_check
        %p162 = pneg %p58
      $region14: #{tpu_custom_call.1} parent=11 // pred_check_branch
        %164 = sbr.rel (%p162) target = $region16
      $region15: #{tpu_custom_call.1} parent=11 // pred_region
        _
      $region16: #{tpu_custom_call.1} parent=11 // pred_fallthru
        _
      // Predicated region
      $region17: #{tpu_custom_call.1} parent=11 // pred_check
        %p165 = pneg %p79
      $region18: #{tpu_custom_call.1} parent=11 // pred_check_branch
        %167 = sbr.rel (%p165) target = $region20
      $region19: #{tpu_custom_call.1} parent=11 // pred_region
        _
      $region20: #{tpu_custom_call.1} parent=11 // pred_fallthru
        _
      // Predicated region
      $region21: #{tpu_custom_call.1} parent=11 // pred_check
        %p168 = pneg %p100
      $region22: #{tpu_custom_call.1} parent=11 // pred_check_branch
        %170 = sbr.rel (%p168) target = $region24
      $region23: #{tpu_custom_call.1} parent=11 // pred_region
        _
      $region24: #{tpu_custom_call.1} parent=11 // pred_fallthru
        _
      // Predicated region
      $region25: #{tpu_custom_call.1} parent=11 // pred_check
        %p171 = pneg %p121
      $region26: #{tpu_custom_call.1} parent=11 // pred_check_branch
        %173 = sbr.rel (%p171) target = $region28
      $region27: #{tpu_custom_call.1} parent=11 // pred_region
        _
      $region28: #{tpu_custom_call.1} parent=11 // pred_fallthru
        _
    $region12: #{tpu_custom_call.1} parent=5 // pred_fallthru
      _
    %p174 = scmp.lt.s32.totalorder %s11, 2
    // Predicated region
    $region29: #{tpu_custom_call.1} parent=5 // pred_check
      %p175 = pneg %p174
    $region30: #{tpu_custom_call.1} parent=5 // pred_check_branch
      %177 = sbr.rel (%p175) target = $region32
    $region31: #{tpu_custom_call.1} parent=5 // pred_region
      // Predicated region
      $region33: #{tpu_custom_call.1} parent=31 // pred_check
        %p178 = pneg %p31
      $region34: #{tpu_custom_call.1} parent=31 // pred_check_branch
        %180 = sbr.rel (%p178) target = $region36
      $region35: #{tpu_custom_call.1} parent=31 // pred_region
        %s181 = smul.u32 16, %s11
        %p182 = scmp.lt.s32.totalorder %s181, 31
        %s183 = scalar_select %p182, %s181, 31
        %s184 = smul.addr %s183, 8
        %s185 = scalar_lea.vmem %s0, %s184
        %s186 = smul.u32 16, %s11
      $region36: #{tpu_custom_call.1} parent=31 // pred_fallthru
        _
    $region32: #{tpu_custom_call.1} parent=5 // pred_fallthru
      _
    %p187 = scmp.le.s32.totalorder 1, %s11
    %p188 = scmp.lt.s32.totalorder %s11, 3
    %p189 = pnand %p187, %p188
    %p190 = pneg %p189
    // Predicated region
    $region37: #{tpu_custom_call.1} parent=5 // pred_check
      _
    $region38: #{tpu_custom_call.1} parent=5 // pred_check_branch
      %192 = sbr.rel (%p189) target = $region40
    $region39: #{tpu_custom_call.1} parent=5 // pred_region
      %s193 = ssub.s32 %s11, 1
      %s194 = smul.u32 16, %s16
      %p195 = scmp.lt.s32.totalorder %s194, 31
      %s196 = scalar_select %p195, %s194, 31
      %s197 = smul.addr %s196, 8
      %s198 = scalar_lea.vmem %s0, %s197
      %p199 = pneg %p37
      %p200 = pneg %p34
      %p201 = pneg %p58
      %p202 = pneg %p55
      %p203 = pneg %p79
      %p204 = pneg %p76
      %p205 = pneg %p100
      %p206 = pneg %p97
      %p207 = pneg %p121
      %p208 = pneg %p118
      %p209 = pneg %p147
      %p210 = pneg %p144
      %s211 = smul.u32 16, %s16
      %p212 = scmp.lt.s32.totalorder %s211, 31
      %s213 = scalar_select %p212, %s211, 31
      %s214 = smul.addr %s213, 8
      %s215 = scalar_lea.vmem %s5, %s214
      %s216 = smul.u32 16, %s16
      %p217 = scmp.lt.s32.totalorder %s216, 31
      %s218 = scalar_select %p217, %s216, 31
      %s219 = smul.addr %s218, 8
      %s220 = scalar_lea.vmem %s0, %s219
      %s221 = smul.u32 16, %s16
      %s222 = smul.u32 16, %s16
      %p223 = scmp.lt.s32.totalorder %s222, 31
      %s224 = scalar_select %p223, %s222, 31
      %s225 = smul.addr %s224, 8
      %s226 = scalar_lea.vmem %s5, %s225
      %s227 = smul.u32 16, %s16
      %v228 = vld [vmem:[%s220] sm:$0xff]
      %v229 = vld [vmem:[%s220 + $0x8] sm:$0xff]
      %v230 = vld [vmem:[%s220 + $0x10] sm:$0xff]
      %v231 = vld [vmem:[%s220 + $0x18] sm:$0xff]
      %v232 = vld [vmem:[%s220 + $0x20] sm:$0xff]
      %v233 = vld [vmem:[%s220 + $0x28] sm:$0xff]
      %v234 = vld [vmem:[%s220 + $0x30] sm:$0xff]
      %v235 = vld [vmem:[%s220 + $0x38] sm:$0xff]
      %v236 = vld [vmem:[%s220 + $0x40] sm:$0xff]
      %v237 = vld [vmem:[%s220 + $0x48] sm:$0xff]
      %v238 = vld [vmem:[%s220 + $0x50] sm:$0xff]
      %v239 = vld [vmem:[%s220 + $0x58] sm:$0xff]
      %v240 = vld [vmem:[%s220 + $0x60] sm:$0xff]
      %v241 = vld [vmem:[%s220 + $0x68] sm:$0xff]
      %v242 = vld [vmem:[%s220 + $0x70] sm:$0xff]
      %v243 = vld [vmem:[%s220 + $0x78] sm:$0xff]
      %v244 = vld [vmem:[%s1] sm:$0xff]
      %v245 = vld [vmem:[%s1 + $0x8] sm:$0xff]
      %v246 = vld [vmem:[%s2] sm:$0x1]
      %v248 = vlaneseq
      %v249 = vshrl.u32 %v248, 7
      %v250 = vsub.s32 0, %v249
      %v251 = vrot.slane %v246, %v250
      %vm253 = vcmask 130048
      %v255 = vsel %vm253, %v228, 0
      %v258 = vsel %vm253, %v229, 0
      %v261 = vsel %vm253, %v230, 0
      %v264 = vsel %vm253, %v231, 0
      %v267 = vsel %vm253, %v232, 0
      %v270 = vsel %vm253, %v233, 0
      %v273 = vsel %vm253, %v234, 0
      %v276 = vsel %vm253, %v235, 0
      %v279 = vsel %vm253, %v236, 0
      %v282 = vsel %vm253, %v237, 0
      %v285 = vsel %vm253, %v238, 0
      %v288 = vsel %vm253, %v239, 0
      %v291 = vsel %vm253, %v240, 0
      %v294 = vsel %vm253, %v241, 0
      %v297 = vsel %vm253, %v242, 0
      %v300 = vsel %vm253, %v243, 0
      %302 = vmatprep.subr.mxu0 0.0
      %303 = vmatpush1.msra.mxu0 %v244
      %304 = vmatprep.subr.mxu0 0.0
      %305 = vmatpush1.msra.mxu0 %v245
      %306 = vmatprep.subr.mxu0 0.0
      %307 = vmatpush1.msra.mxu0 0.0
      %308 = vmatprep.subr.mxu0 0.0
      %309 = vmatpush1.msra.mxu0 0.0
      %310 = vmatprep.subr.mxu0 0.0
      %311 = vmatpush1.msra.mxu0 0.0
      %312 = vmatprep.subr.mxu0 0.0
      %313 = vmatpush1.msra.mxu0 0.0
      %314 = vmatprep.subr.mxu0 0.0
      %315 = vmatpush1.msra.mxu0 0.0
      %316 = vmatprep.subr.mxu0 0.0
      %317 = vmatpush1.msra.mxu0 0.0
      %318 = vmatprep.subr.mxu0 0.0
      %319 = vmatpush1.msra.mxu0 0.0
      %320 = vmatprep.subr.mxu0 0.0
      %321 = vmatpush1.msra.mxu0 0.0
      %322 = vmatprep.subr.mxu0 0.0
      %323 = vmatpush1.msra.mxu0 0.0
      %324 = vmatprep.subr.mxu0 0.0
      %325 = vmatpush1.msra.mxu0 0.0
      %326 = vmatprep.subr.mxu0 0.0
      %327 = vmatpush1.msra.mxu0 0.0
      %328 = vmatprep.subr.mxu0 0.0
      %329 = vmatpush1.msra.mxu0 0.0
      %330 = vmatprep.subr.mxu0 0.0
      %331 = vmatpush1.msra.mxu0 0.0
      %332 = vmatprep.subr.mxu0 0.0
      %333 = vmatpush1.msra.mxu0 0.0
      %334 = vmatprep.subr.mxu0 0.0
      %335 = vmatpush1.msra.mxu0 0.0
      %336 = vmatprep.subr.mxu0 0.0
      %337 = vmatpush1.msra.mxu0 0.0
      %338 = vmatprep.subr.mxu0 0.0
      %339 = vmatpush1.msra.mxu0 0.0
      %340 = vmatprep.subr.mxu0 0.0
      %341 = vmatpush1.msra.mxu0 0.0
      %342 = vmatprep.subr.mxu0 0.0
      %343 = vmatpush1.msra.mxu0 0.0
      %344 = vmatprep.subr.mxu0 0.0
      %345 = vmatpush1.msra.mxu0 0.0
      %346 = vmatprep.subr.mxu0 0.0
      %347 = vmatpush1.msra.mxu0 0.0
      %348 = vmatprep.subr.mxu0 0.0
      %349 = vmatpush1.msra.mxu0 0.0
      %350 = vmatprep.subr.mxu0 0.0
      %351 = vmatpush1.msra.mxu0 0.0
      %352 = vmatprep.subr.mxu0 0.0
      %353 = vmatpush1.msra.mxu0 0.0
      %354 = vmatprep.subr.mxu0 0.0
      %355 = vmatpush1.msra.mxu0 0.0
      %356 = vmatprep.subr.mxu0 0.0
      %357 = vmatpush1.msra.mxu0 0.0
      %358 = vmatprep.subr.mxu0 0.0
      %359 = vmatpush1.msra.mxu0 0.0
      %360 = vmatprep.subr.mxu0 0.0
      %361 = vmatpush1.msra.mxu0 0.0
      %362 = vmatprep.subr.mxu0 0.0
      %363 = vmatpush1.msra.mxu0 0.0
      %364 = vmatprep.subr.mxu0 0.0
      %365 = vmatpush1.msra.mxu0 0.0
      %366 = vmatprep.mubr.f32.mxu0 0.0
      %367 = vmatmul.mubr.f32.gmra.mrb[0].mxu0 %v255
      %v368 = vpop.f32.mrb[0].mxu0
      %v369 = vadd.f32 %v251, %v368
      %v370 = vpop.f32.mrb[0].mxu0
      %371 = vmatprep.mubr.f32.mxu0 0.0
      %372 = vmatmul.mubr.f32.gmra.mrb[0].mxu0 %v258
      %v373 = vpop.f32.mrb[0].mxu0
      %v374 = vadd.f32 %v251, %v373
      %v375 = vpop.f32.mrb[0].mxu0
      %376 = vmatprep.mubr.f32.mxu0 0.0
      %377 = vmatmul.mubr.f32.gmra.mrb[0].mxu0 %v261
      %v378 = vpop.f32.mrb[0].mxu0
      %v379 = vadd.f32 %v251, %v378
      %v380 = vpop.f32.mrb[0].mxu0
      %381 = vmatprep.mubr.f32.mxu0 0.0
      %382 = vmatmul.mubr.f32.gmra.mrb[0].mxu0 %v264
      %v383 = vpop.f32.mrb[0].mxu0
      %v384 = vadd.f32 %v251, %v383
      %v385 = vpop.f32.mrb[0].mxu0
      %386 = vmatprep.mubr.f32.mxu0 0.0
      %387 = vmatmul.mubr.f32.gmra.mrb[0].mxu0 %v267
      %v388 = vpop.f32.mrb[0].mxu0
      %v389 = vadd.f32 %v251, %v388
      %v390 = vpop.f32.mrb[0].mxu0
      %391 = vmatprep.mubr.f32.mxu0 0.0
      %392 = vmatmul.mubr.f32.gmra.mrb[0].mxu0 %v270
      %v393 = vpop.f32.mrb[0].mxu0
      %v394 = vadd.f32 %v251, %v393
      %v395 = vpop.f32.mrb[0].mxu0
      %396 = vmatprep.mubr.f32.mxu0 0.0
      %397 = vmatmul.mubr.f32.gmra.mrb[0].mxu0 %v273
      %v398 = vpop.f32.mrb[0].mxu0
      %v399 = vadd.f32 %v251, %v398
      %v400 = vpop.f32.mrb[0].mxu0
      %401 = vmatprep.mubr.f32.mxu0 0.0
      %402 = vmatmul.mubr.f32.gmra.mrb[0].mxu0 %v276
      %v403 = vpop.f32.mrb[0].mxu0
      %v404 = vadd.f32 %v251, %v403
      %v405 = vpop.f32.mrb[0].mxu0
      %406 = vmatprep.mubr.f32.mxu0 0.0
      %407 = vmatmul.mubr.f32.gmra.mrb[0].mxu0 %v279
      %v408 = vpop.f32.mrb[0].mxu0
      %v409 = vadd.f32 %v251, %v408
      %v410 = vpop.f32.mrb[0].mxu0
      %411 = vmatprep.mubr.f32.mxu0 0.0
      %412 = vmatmul.mubr.f32.gmra.mrb[0].mxu0 %v282
      %v413 = vpop.f32.mrb[0].mxu0
      %v414 = vadd.f32 %v251, %v413
      %v415 = vpop.f32.mrb[0].mxu0
      %416 = vmatprep.mubr.f32.mxu0 0.0
      %417 = vmatmul.mubr.f32.gmra.mrb[0].mxu0 %v285
      %v418 = vpop.f32.mrb[0].mxu0
      %v419 = vadd.f32 %v251, %v418
      %v420 = vpop.f32.mrb[0].mxu0
      %421 = vmatprep.mubr.f32.mxu0 0.0
      %422 = vmatmul.mubr.f32.gmra.mrb[0].mxu0 %v288
      %v423 = vpop.f32.mrb[0].mxu0
      %v424 = vadd.f32 %v251, %v423
      %v425 = vpop.f32.mrb[0].mxu0
      %426 = vmatprep.mubr.f32.mxu0 0.0
      %427 = vmatmul.mubr.f32.gmra.mrb[0].mxu0 %v291
      %v428 = vpop.f32.mrb[0].mxu0
      %v429 = vadd.f32 %v251, %v428
      %v430 = vpop.f32.mrb[0].mxu0
      %431 = vmatprep.mubr.f32.mxu0 0.0
      %432 = vmatmul.mubr.f32.gmra.mrb[0].mxu0 %v294
      %v433 = vpop.f32.mrb[0].mxu0
      %v434 = vadd.f32 %v251, %v433
      %v435 = vpop.f32.mrb[0].mxu0
      %436 = vmatprep.mubr.f32.mxu0 0.0
      %437 = vmatmul.mubr.f32.gmra.mrb[0].mxu0 %v297
      %v438 = vpop.f32.mrb[0].mxu0
      %v439 = vadd.f32 %v251, %v438
      %v440 = vpop.f32.mrb[0].mxu0
      %441 = vmatprep.mubr.f32.mxu0 0.0
      %442 = vmatmul.mubr.f32.gmra.mrb[0].mxu0 %v300
      %v443 = vpop.f32.mrb[0].mxu0
      %v444 = vadd.f32 %v251, %v443
      %v445 = vpop.f32.mrb[0].mxu0
      %446 = vdwg.mxu0
      %v447 = vmax.f32 %v369, 0.0
      %v448 = vmax.f32 %v374, 0.0
      %v449 = vmax.f32 %v379, 0.0
      %v450 = vmax.f32 %v384, 0.0
      %v451 = vmax.f32 %v389, 0.0
      %v452 = vmax.f32 %v394, 0.0
      %v453 = vmax.f32 %v399, 0.0
      %v454 = vmax.f32 %v404, 0.0
      %v455 = vmax.f32 %v409, 0.0
      %v456 = vmax.f32 %v414, 0.0
      %v457 = vmax.f32 %v419, 0.0
      %v458 = vmax.f32 %v424, 0.0
      %v459 = vmax.f32 %v429, 0.0
      %v460 = vmax.f32 %v434, 0.0
      %v461 = vmax.f32 %v439, 0.0
      %v462 = vmax.f32 %v444, 0.0
      %v463 = vld [vmem:[%s3] sm:$0xff]
      %v464 = vld [vmem:[%s3 + $0x8] sm:$0xff]
      %v465 = vld [vmem:[%s3 + $0x10] sm:$0xff]
      %v466 = vld [vmem:[%s3 + $0x18] sm:$0xff]
      %v467 = vld [vmem:[%s3 + $0x20] sm:$0xff]
      %v468 = vld [vmem:[%s3 + $0x28] sm:$0xff]
      %v469 = vld [vmem:[%s3 + $0x30] sm:$0xff]
      %v470 = vld [vmem:[%s3 + $0x38] sm:$0xff]
      %v471 = vld [vmem:[%s3 + $0x40] sm:$0xff]
      %v472 = vld [vmem:[%s3 + $0x48] sm:$0xff]
      %v473 = vld [vmem:[%s3 + $0x50] sm:$0xff]
      %v474 = vld [vmem:[%s3 + $0x58] sm:$0xff]
      %v475 = vld [vmem:[%s3 + $0x60] sm:$0xff]
      %v476 = vld [vmem:[%s3 + $0x68] sm:$0xff]
      %v477 = vld [vmem:[%s3 + $0x70] sm:$0xff]
      %v478 = vld [vmem:[%s3 + $0x78] sm:$0xff]
      %v479 = vld [vmem:[%s4] sm:$0x1]
      %v481 = vlaneseq
      %v482 = vshrl.u32 %v481, 7
      %v483 = vsub.s32 0, %v482
      %v484 = vrot.slane %v479, %v483
      %486 = vmatprep.subr.mxu0 0.0
      %487 = vmatpush1.msra.mxu0 %v463
      %488 = vmatprep.subr.mxu0 0.0
      %489 = vmatpush1.msra.mxu0 %v464
      %490 = vmatprep.subr.mxu0 0.0
      %491 = vmatpush1.msra.mxu0 %v465
      %492 = vmatprep.subr.mxu0 0.0
      %493 = vmatpush1.msra.mxu0 %v466
      %494 = vmatprep.subr.mxu0 0.0
      %495 = vmatpush1.msra.mxu0 %v467
      %496 = vmatprep.subr.mxu0 0.0
      %497 = vmatpush1.msra.mxu0 %v468
      %498 = vmatprep.subr.mxu0 0.0
      %499 = vmatpush1.msra.mxu0 %v469
      %500 = vmatprep.subr.mxu0 0.0
      %501 = vmatpush1.msra.mxu0 %v470
      %502 = vmatprep.subr.mxu0 0.0
      %503 = vmatpush1.msra.mxu0 %v471
      %504 = vmatprep.subr.mxu0 0.0
      %505 = vmatpush1.msra.mxu0 %v472
      %506 = vmatprep.subr.mxu0 0.0
      %507 = vmatpush1.msra.mxu0 %v473
      %508 = vmatprep.subr.mxu0 0.0
      %509 = vmatpush1.msra.mxu0 %v474
      %510 = vmatprep.subr.mxu0 0.0
      %511 = vmatpush1.msra.mxu0 %v475
      %512 = vmatprep.subr.mxu0 0.0
      %513 = vmatpush1.msra.mxu0 %v476
      %514 = vmatprep.subr.mxu0 0.0
      %515 = vmatpush1.msra.mxu0 %v477
      %516 = vmatprep.subr.mxu0 0.0
      %517 = vmatpush1.msra.mxu0 %v478
      %518 = vmatprep.subr.mxu0 0.0
      %519 = vmatpush1.msra.mxu0 0.0
      %520 = vmatprep.subr.mxu0 0.0
      %521 = vmatpush1.msra.mxu0 0.0
      %522 = vmatprep.subr.mxu0 0.0
      %523 = vmatpush1.msra.mxu0 0.0
      %524 = vmatprep.subr.mxu0 0.0
      %525 = vmatpush1.msra.mxu0 0.0
      %526 = vmatprep.subr.mxu0 0.0
      %527 = vmatpush1.msra.mxu0 0.0
      %528 = vmatprep.subr.mxu0 0.0
      %529 = vmatpush1.msra.mxu0 0.0
      %530 = vmatprep.subr.mxu0 0.0
      %531 = vmatpush1.msra.mxu0 0.0
      %532 = vmatprep.subr.mxu0 0.0
      %533 = vmatpush1.msra.mxu0 0.0
      %534 = vmatprep.subr.mxu0 0.0
      %535 = vmatpush1.msra.mxu0 0.0
      %536 = vmatprep.subr.mxu0 0.0
      %537 = vmatpush1.msra.mxu0 0.0
      %538 = vmatprep.subr.mxu0 0.0
      %539 = vmatpush1.msra.mxu0 0.0
      %540 = vmatprep.subr.mxu0 0.0
      %541 = vmatpush1.msra.mxu0 0.0
      %542 = vmatprep.subr.mxu0 0.0
      %543 = vmatpush1.msra.mxu0 0.0
      %544 = vmatprep.subr.mxu0 0.0
      %545 = vmatpush1.msra.mxu0 0.0
      %546 = vmatprep.subr.mxu0 0.0
      %547 = vmatpush1.msra.mxu0 0.0
      %548 = vmatprep.subr.mxu0 0.0
      %549 = vmatpush1.msra.mxu0 0.0
      %550 = vmatprep.mubr.f32.mxu0 0.0
      %551 = vmatmul.mubr.f32.gmra.mrb[0].mxu0 %v447
      %v552 = vpop.f32.mrb[0].mxu0
      %v553 = vadd.f32 %v484, %v552
      %v554 = vpop.f32.mrb[0].mxu0
      %555 = vmatprep.mubr.f32.mxu0 0.0
      %556 = vmatmul.mubr.f32.gmra.mrb[0].mxu0 %v448
      %v557 = vpop.f32.mrb[0].mxu0
      %v558 = vadd.f32 %v484, %v557
      %v559 = vpop.f32.mrb[0].mxu0
      %560 = vmatprep.mubr.f32.mxu0 0.0
      %561 = vmatmul.mubr.f32.gmra.mrb[0].mxu0 %v449
      %v562 = vpop.f32.mrb[0].mxu0
      %v563 = vadd.f32 %v484, %v562
      %v564 = vpop.f32.mrb[0].mxu0
      %565 = vmatprep.mubr.f32.mxu0 0.0
      %566 = vmatmul.mubr.f32.gmra.mrb[0].mxu0 %v450
      %v567 = vpop.f32.mrb[0].mxu0
      %v568 = vadd.f32 %v484, %v567
      %v569 = vpop.f32.mrb[0].mxu0
      %570 = vmatprep.mubr.f32.mxu0 0.0
      %571 = vmatmul.mubr.f32.gmra.mrb[0].mxu0 %v451
      %v572 = vpop.f32.mrb[0].mxu0
      %v573 = vadd.f32 %v484, %v572
      %v574 = vpop.f32.mrb[0].mxu0
      %575 = vmatprep.mubr.f32.mxu0 0.0
      %576 = vmatmul.mubr.f32.gmra.mrb[0].mxu0 %v452
      %v577 = vpop.f32.mrb[0].mxu0
      %v578 = vadd.f32 %v484, %v577
      %v579 = vpop.f32.mrb[0].mxu0
      %580 = vmatprep.mubr.f32.mxu0 0.0
      %581 = vmatmul.mubr.f32.gmra.mrb[0].mxu0 %v453
      %v582 = vpop.f32.mrb[0].mxu0
      %v583 = vadd.f32 %v484, %v582
      %v584 = vpop.f32.mrb[0].mxu0
      %585 = vmatprep.mubr.f32.mxu0 0.0
      %586 = vmatmul.mubr.f32.gmra.mrb[0].mxu0 %v454
      %v587 = vpop.f32.mrb[0].mxu0
      %v588 = vadd.f32 %v484, %v587
      %v589 = vpop.f32.mrb[0].mxu0
      %590 = vmatprep.mubr.f32.mxu0 0.0
      %591 = vmatmul.mubr.f32.gmra.mrb[0].mxu0 %v455
      %v592 = vpop.f32.mrb[0].mxu0
      %v593 = vadd.f32 %v484, %v592
      %v594 = vpop.f32.mrb[0].mxu0
      %595 = vmatprep.mubr.f32.mxu0 0.0
      %596 = vmatmul.mubr.f32.gmra.mrb[0].mxu0 %v456
      %v597 = vpop.f32.mrb[0].mxu0
      %v598 = vadd.f32 %v484, %v597
      %v599 = vpop.f32.mrb[0].mxu0
      %600 = vmatprep.mubr.f32.mxu0 0.0
      %601 = vmatmul.mubr.f32.gmra.mrb[0].mxu0 %v457
      %v602 = vpop.f32.mrb[0].mxu0
      %v603 = vadd.f32 %v484, %v602
      %v604 = vpop.f32.mrb[0].mxu0
      %605 = vmatprep.mubr.f32.mxu0 0.0
      %606 = vmatmul.mubr.f32.gmra.mrb[0].mxu0 %v458
      %v607 = vpop.f32.mrb[0].mxu0
      %v608 = vadd.f32 %v484, %v607
      %v609 = vpop.f32.mrb[0].mxu0
      %610 = vmatprep.mubr.f32.mxu0 0.0
      %611 = vmatmul.mubr.f32.gmra.mrb[0].mxu0 %v459
      %v612 = vpop.f32.mrb[0].mxu0
      %v613 = vadd.f32 %v484, %v612
      %v614 = vpop.f32.mrb[0].mxu0
      %615 = vmatprep.mubr.f32.mxu0 0.0
      %616 = vmatmul.mubr.f32.gmra.mrb[0].mxu0 %v460
      %v617 = vpop.f32.mrb[0].mxu0
      %v618 = vadd.f32 %v484, %v617
      %v619 = vpop.f32.mrb[0].mxu0
      %620 = vmatprep.mubr.f32.mxu0 0.0
      %621 = vmatmul.mubr.f32.gmra.mrb[0].mxu0 %v461
      %v622 = vpop.f32.mrb[0].mxu0
      %v623 = vadd.f32 %v484, %v622
      %v624 = vpop.f32.mrb[0].mxu0
      %625 = vmatprep.mubr.f32.mxu0 0.0
      %626 = vmatmul.mubr.f32.gmra.mrb[0].mxu0 %v462
      %v627 = vpop.f32.mrb[0].mxu0
      %v628 = vadd.f32 %v484, %v627
      %v629 = vpop.f32.mrb[0].mxu0
      %630 = vdwg.mxu0
      %vm631 = vcmask 31744
      %632 = vst.msk [vmem:[%s226] sm:$0xff] %vm631, %v553
      %633 = vst.msk [vmem:[%s226 + $0x8] sm:$0xff] %vm631, %v558
      %634 = vst.msk [vmem:[%s226 + $0x10] sm:$0xff] %vm631, %v563
      %635 = vst.msk [vmem:[%s226 + $0x18] sm:$0xff] %vm631, %v568
      %636 = vst.msk [vmem:[%s226 + $0x20] sm:$0xff] %vm631, %v573
      %637 = vst.msk [vmem:[%s226 + $0x28] sm:$0xff] %vm631, %v578
      %638 = vst.msk [vmem:[%s226 + $0x30] sm:$0xff] %vm631, %v583
      %639 = vst.msk [vmem:[%s226 + $0x38] sm:$0xff] %vm631, %v588
      %640 = vst.msk [vmem:[%s226 + $0x40] sm:$0xff] %vm631, %v593
      %641 = vst.msk [vmem:[%s226 + $0x48] sm:$0xff] %vm631, %v598
      %642 = vst.msk [vmem:[%s226 + $0x50] sm:$0xff] %vm631, %v603
      %643 = vst.msk [vmem:[%s226 + $0x58] sm:$0xff] %vm631, %v608
      %644 = vst.msk [vmem:[%s226 + $0x60] sm:$0xff] %vm631, %v613
      %645 = vst.msk [vmem:[%s226 + $0x68] sm:$0xff] %vm631, %v618
      %646 = vst.msk [vmem:[%s226 + $0x70] sm:$0xff] %vm631, %v623
      %647 = vst.msk [vmem:[%s226 + $0x78] sm:$0xff] %vm631, %v628
      %s648 = smul.u32 16, %s16
      %p649 = scmp.lt.s32.totalorder %s648, 31
      %s650 = scalar_select %p649, %s648, 31
      %s651 = smul.addr %s650, 8
      %s652 = scalar_lea.vmem %s5, %s651
      // Predicated region
      $region41: #{tpu_custom_call.1} parent=39 // pred_check
        %p653 = pneg %p144
      $region42: #{tpu_custom_call.1} parent=39 // pred_check_branch
        %655 = sbr.rel (%p653) target = $region44
      $region43: #{tpu_custom_call.1} parent=39 // pred_region
        %s656 = smul.u32 16, %s16
      $region44: #{tpu_custom_call.1} parent=39 // pred_fallthru
        _
    $region40: #{tpu_custom_call.1} parent=5 // pred_fallthru
      _
    %p657 = scmp.le.s32.totalorder 2, %s11
    // Predicated region
    $region45: #{tpu_custom_call.1} parent=5 // pred_check
      %p658 = pneg %p657
    $region46: #{tpu_custom_call.1} parent=5 // pred_check_branch
      %660 = sbr.rel (%p658) target = $region48
    $region47: #{tpu_custom_call.1} parent=5 // pred_region
      %s661 = ssub.s32 %s11, 2
      // Predicated region
      $region49: #{tpu_custom_call.1} parent=47 // pred_check
        %p662 = pneg %p150
      $region50: #{tpu_custom_call.1} parent=47 // pred_check_branch
        %664 = sbr.rel (%p662) target = $region52
      $region51: #{tpu_custom_call.1} parent=47 // pred_region
        %s665 = smul.u32 16, %s17
        %p666 = scmp.lt.s32.totalorder %s665, 31
        %s667 = scalar_select %p666, %s665, 31
        %s668 = smul.addr %s667, 8
        %s669 = scalar_lea.vmem %s5, %s668
      $region52: #{tpu_custom_call.1} parent=47 // pred_fallthru
        _
    $region48: #{tpu_custom_call.1} parent=5 // pred_fallthru
      _
  $region6: #{tpu_custom_call.1} parent=0 // loop_footer
    %s15 = sadd.s32 1, %s11
  $region7: #{tpu_custom_call.1} parent=0 // loop_footer_branch
    %10 = sbr.rel target = $region3
  $region8: #{tpu_custom_call.1} parent=0 // loop_exit
    _

// kernel: tpu_custom_call.1
$region0: #{tpu_custom_call.1}
  #allocation0 [shape = 'u32[]', space=smem, size = 0x4, offset = 0x4, fixed_abs, tag = 'smem constant byte address 0x4 - core index']
  #allocation1 [shape = 'u32[144,128]{1,0:T(1,128)}', space=vmem, size = 0x12000, scoped, tag = 'internal scratch']
  %s0 = inlined_call_operand.vmem [shape: f32[256,16], index: 0, kind: input, shape index: {}]
  %s1 = inlined_call_operand.vmem [shape: f32[16,128], index: 1, kind: input, shape index: {}]
  %s2 = inlined_call_operand.vmem [shape: f32[1,128], index: 2, kind: input, shape index: {}]
  %s3 = inlined_call_operand.vmem [shape: f32[128,4], index: 3, kind: input, shape index: {}]
  %s4 = inlined_call_operand.vmem [shape: f32[1,4], index: 4, kind: input, shape index: {}]
  %s5 = inlined_call_operand.vmem [shape: f32[256,4], index: 5, kind: output, shape index: {}]
  %s6 = sld [smem:[#allocation0]]
  $region53: #{tpu_custom_call.1} parent=0
    _
  %s8 = ssub.s32 1, %s6
  %s9 = scalar_select 0, %s8, %s6
  loop: start=0, step=1, limit=4
  $region2: #{tpu_custom_call.1} parent=0 // loop_pre_header
    _
  $region3: #{tpu_custom_call.1} parent=0 // loop_header
    %s11 = sphi 0, %s15
    %p12 = scmp.ge.s32.totalorder %s11, 4
    %s21 = sphi 0, %s23
    %s24 = sphi 0, %s21
    %s25 = sphi 0, %s24
    %s41 = sphi 0, %s25
    %s45 = sphi 0, %s45
    %s47 = sphi 0, %s45
    %s48 = sphi 0, %s47
    %s62 = sphi 0, %s48
    %s66 = sphi 0, %s66
    %s68 = sphi 0, %s66
    %s69 = sphi 0, %s68
    %s83 = sphi 0, %s69
    %s87 = sphi 0, %s87
    %s89 = sphi 0, %s87
    %s90 = sphi 0, %s89
    %s104 = sphi 0, %s90
    %s108 = sphi 0, %s108
    %s110 = sphi 0, %s108
    %s111 = sphi 0, %s110
    %s125 = sphi 0, %s111
    %s131 = sphi 0, %s133
    %s134 = sphi 0, %s131
    %s135 = sphi 0, %s134
    %s151 = sphi 0, %s135
  $region4: #{tpu_custom_call.1} parent=0 // loop_header_branch
    %14 = sbr.rel (%p12) target = $region8
  $region5: #{tpu_custom_call.1} parent=0 // loop_body
    %s16 = ssub.s32 %s11, 1
    %s17 = ssub.s32 %s11, 2
    %s18 = sadd.s32 %s11, 1
    %s19 = ssub.s32 %s11, %s18
    %p20 = scmp.eq.s32.totalorder %s19, 0
    %s22 = sadd.s32 %s21, 1
    %s23 = scalar_select %p20, %s21, %s22
    %p26 = pneg %p20
    %p27 = scmp.eq.s32.totalorder %s11, 1
    %p28 = por %p26, %p27
    %p29 = scmp.ne.s32.totalorder %s21, %s24
    %p30 = scmp.eq.s32.totalorder %s11, 0
    %p31 = por %p29, %p30
    %p32 = scmp.ne.s32.totalorder %s21, %s24
    %p33 = scmp.eq.s32.totalorder %s16, 1
    %p34 = por %p32, %p33
    %p35 = scmp.ne.s32.totalorder %s24, %s25
    %p36 = scmp.eq.s32.totalorder %s16, 0
    %p37 = por %p35, %p36
    %p38 = scmp.ne.s32.totalorder %s24, %s25
    %p39 = scmp.eq.s32.totalorder %s17, 1
    %p40 = por %p38, %p39
    %p42 = scmp.ne.s32.totalorder %s25, %s41
    %p43 = scmp.eq.s32.totalorder %s17, 0
    %p44 = por %p42, %p43
    %s46 = sadd.s32 %s45, 1
    %p49 = scmp.eq.s32.totalorder %s11, 1
    %p50 = scmp.ne.s32.totalorder %s45, %s47
    %p51 = scmp.eq.s32.totalorder %s11, 0
    %p52 = por %p50, %p51
    %p53 = scmp.ne.s32.totalorder %s45, %s47
    %p54 = scmp.eq.s32.totalorder %s16, 1
    %p55 = por %p53, %p54
    %p56 = scmp.ne.s32.totalorder %s47, %s48
    %p57 = scmp.eq.s32.totalorder %s16, 0
    %p58 = por %p56, %p57
    %p59 = scmp.ne.s32.totalorder %s47, %s48
    %p60 = scmp.eq.s32.totalorder %s17, 1
    %p61 = por %p59, %p60
    %p63 = scmp.ne.s32.totalorder %s48, %s62
    %p64 = scmp.eq.s32.totalorder %s17, 0
    %p65 = por %p63, %p64
    %s67 = sadd.s32 %s66, 1
    %p70 = scmp.eq.s32.totalorder %s11, 1
    %p71 = scmp.ne.s32.totalorder %s66, %s68
    %p72 = scmp.eq.s32.totalorder %s11, 0
    %p73 = por %p71, %p72
    %p74 = scmp.ne.s32.totalorder %s66, %s68
    %p75 = scmp.eq.s32.totalorder %s16, 1
    %p76 = por %p74, %p75
    %p77 = scmp.ne.s32.totalorder %s68, %s69
    %p78 = scmp.eq.s32.totalorder %s16, 0
    %p79 = por %p77, %p78
    %p80 = scmp.ne.s32.totalorder %s68, %s69
    %p81 = scmp.eq.s32.totalorder %s17, 1
    %p82 = por %p80, %p81
    %p84 = scmp.ne.s32.totalorder %s69, %s83
    %p85 = scmp.eq.s32.totalorder %s17, 0
    %p86 = por %p84, %p85
    %s88 = sadd.s32 %s87, 1
    %p91 = scmp.eq.s32.totalorder %s11, 1
    %p92 = scmp.ne.s32.totalorder %s87, %s89
    %p93 = scmp.eq.s32.totalorder %s11, 0
    %p94 = por %p92, %p93
    %p95 = scmp.ne.s32.totalorder %s87, %s89
    %p96 = scmp.eq.s32.totalorder %s16, 1
    %p97 = por %p95, %p96
    %p98 = scmp.ne.s32.totalorder %s89, %s90
    %p99 = scmp.eq.s32.totalorder %s16, 0
    %p100 = por %p98, %p99
    %p101 = scmp.ne.s32.totalorder %s89, %s90
    %p102 = scmp.eq.s32.totalorder %s17, 1
    %p103 = por %p101, %p102
    %p105 = scmp.ne.s32.totalorder %s90, %s104
    %p106 = scmp.eq.s32.totalorder %s17, 0
    %p107 = por %p105, %p106
    %s109 = sadd.s32 %s108, 1
    %p112 = scmp.eq.s32.totalorder %s11, 1
    %p113 = scmp.ne.s32.totalorder %s108, %s110
    %p114 = scmp.eq.s32.totalorder %s11, 0
    %p115 = por %p113, %p114
    %p116 = scmp.ne.s32.totalorder %s108, %s110
    %p117 = scmp.eq.s32.totalorder %s16, 1
    %p118 = por %p116, %p117
    %p119 = scmp.ne.s32.totalorder %s110, %s111
    %p120 = scmp.eq.s32.totalorder %s16, 0
    %p121 = por %p119, %p120
    %p122 = scmp.ne.s32.totalorder %s110, %s111
    %p123 = scmp.eq.s32.totalorder %s17, 1
    %p124 = por %p122, %p123
    %p126 = scmp.ne.s32.totalorder %s111, %s125
    %p127 = scmp.eq.s32.totalorder %s17, 0
    %p128 = por %p126, %p127
    %s129 = ssub.s32 %s11, %s18
    %p130 = scmp.eq.s32.totalorder %s129, 0
    %s132 = sadd.s32 %s131, 1
    %s133 = scalar_select %p130, %s131, %s132
    %p136 = pneg %p130
    %p137 = scmp.eq.s32.totalorder %s11, 1
    %p138 = por %p136, %p137
    %p139 = scmp.ne.s32.totalorder %s131, %s134
    %p140 = scmp.eq.s32.totalorder %s11, 0
    %p141 = por %p139, %p140
    %p142 = scmp.ne.s32.totalorder %s131, %s134
    %p143 = scmp.eq.s32.totalorder %s16, 1
    %p144 = por %p142, %p143
    %p145 = scmp.ne.s32.totalorder %s134, %s135
    %p146 = scmp.eq.s32.totalorder %s16, 0
    %p147 = por %p145, %p146
    %p148 = scmp.ne.s32.totalorder %s134, %s135
    %p149 = scmp.eq.s32.totalorder %s17, 1
    %p150 = por %p148, %p149
    %p152 = scmp.ne.s32.totalorder %s135, %s151
    %p153 = scmp.eq.s32.totalorder %s17, 0
    %p154 = por %p152, %p153
    %p155 = scmp.le.s32.totalorder 1, %s11
    %p156 = scmp.lt.s32.totalorder %s11, 3
    %p157 = pnand %p155, %p156
    %p158 = pneg %p157
    // Predicated region
    $region9: #{tpu_custom_call.1} parent=5 // pred_check
      _
    $region10: #{tpu_custom_call.1} parent=5 // pred_check_branch
      %160 = sbr.rel (%p157) target = $region12
    $region11: #{tpu_custom_call.1} parent=5 // pred_region
      %s161 = ssub.s32 %s11, 1
      // Predicated region
      $region13: #{tpu_custom_call.1} parent=11 // pred_check
        %p162 = pneg %p58
      $region14: #{tpu_custom_call.1} parent=11 // pred_check_branch
        %164 = sbr.rel (%p162) target = $region16
      $region15: #{tpu_custom_call.1} parent=11 // pred_region
        _
      $region16: #{tpu_custom_call.1} parent=11 // pred_fallthru
        _
      // Predicated region
      $region17: #{tpu_custom_call.1} parent=11 // pred_check
        %p165 = pneg %p79
      $region18: #{tpu_custom_call.1} parent=11 // pred_check_branch
        %167 = sbr.rel (%p165) target = $region20
      $region19: #{tpu_custom_call.1} parent=11 // pred_region
        _
      $region20: #{tpu_custom_call.1} parent=11 // pred_fallthru
        _
      // Predicated region
      $region21: #{tpu_custom_call.1} parent=11 // pred_check
        %p168 = pneg %p100
      $region22: #{tpu_custom_call.1} parent=11 // pred_check_branch
        %170 = sbr.rel (%p168) target = $region24
      $region23: #{tpu_custom_call.1} parent=11 // pred_region
        _
      $region24: #{tpu_custom_call.1} parent=11 // pred_fallthru
        _
      // Predicated region
      $region25: #{tpu_custom_call.1} parent=11 // pred_check
        %p171 = pneg %p121
      $region26: #{tpu_custom_call.1} parent=11 // pred_check_branch
        %173 = sbr.rel (%p171) target = $region28
      $region27: #{tpu_custom_call.1} parent=11 // pred_region
        _
      $region28: #{tpu_custom_call.1} parent=11 // pred_fallthru
        _
    $region12: #{tpu_custom_call.1} parent=5 // pred_fallthru
      _
    %p174 = scmp.lt.s32.totalorder %s11, 2
    // Predicated region
    $region29: #{tpu_custom_call.1} parent=5 // pred_check
      %p175 = pneg %p174
    $region30: #{tpu_custom_call.1} parent=5 // pred_check_branch
      %177 = sbr.rel (%p175) target = $region32
    $region31: #{tpu_custom_call.1} parent=5 // pred_region
      // Predicated region
      $region33: #{tpu_custom_call.1} parent=31 // pred_check
        %p178 = pneg %p31
      $region34: #{tpu_custom_call.1} parent=31 // pred_check_branch
        %180 = sbr.rel (%p178) target = $region36
      $region35: #{tpu_custom_call.1} parent=31 // pred_region
        %s181 = smul.u32 16, %s11
        %p182 = scmp.lt.s32.totalorder %s181, 31
        %s183 = scalar_select %p182, %s181, 31
        %s184 = smul.addr %s183, 8
        %s185 = scalar_lea.vmem %s0, %s184
        %s186 = smul.u32 16, %s11
      $region36: #{tpu_custom_call.1} parent=31 // pred_fallthru
        _
    $region32: #{tpu_custom_call.1} parent=5 // pred_fallthru
      _
    %p187 = scmp.le.s32.totalorder 1, %s11
    %p188 = scmp.lt.s32.totalorder %s11, 3
    %p189 = pnand %p187, %p188
    %p190 = pneg %p189
    // Predicated region
    $region37: #{tpu_custom_call.1} parent=5 // pred_check
      _
    $region38: #{tpu_custom_call.1} parent=5 // pred_check_branch
      %192 = sbr.rel (%p189) target = $region40
    $region39: #{tpu_custom_call.1} parent=5 // pred_region
      %s193 = ssub.s32 %s11, 1
      %s194 = smul.u32 16, %s16
      %p195 = scmp.lt.s32.totalorder %s194, 31
      %s196 = scalar_select %p195, %s194, 31
      %s197 = smul.addr %s196, 8
      %s198 = scalar_lea.vmem %s0, %s197
      %p199 = pneg %p37
      %p200 = pneg %p34
      %p201 = pneg %p58
      %p202 = pneg %p55
      %p203 = pneg %p79
      %p204 = pneg %p76
      %p205 = pneg %p100
      %p206 = pneg %p97
      %p207 = pneg %p121
      %p208 = pneg %p118
      %p209 = pneg %p147
      %p210 = pneg %p144
      %s211 = smul.u32 16, %s16
      %p212 = scmp.lt.s32.totalorder %s211, 31
      %s213 = scalar_select %p212, %s211, 31
      %s214 = smul.addr %s213, 8
      %s215 = scalar_lea.vmem %s5, %s214
      %s216 = smul.u32 16, %s16
      %p217 = scmp.lt.s32.totalorder %s216, 31
      %s218 = scalar_select %p217, %s216, 31
      %s219 = smul.addr %s218, 8
      %s220 = scalar_lea.vmem %s0, %s219
      %s221 = smul.u32 16, %s16
      %s222 = smul.u32 16, %s16
      %p223 = scmp.lt.s32.totalorder %s222, 31
      %s224 = scalar_select %p223, %s222, 31
      %s225 = smul.addr %s224, 8
      %s226 = scalar_lea.vmem %s5, %s225
      %s227 = smul.u32 16, %s16
      %v228 = vld [vmem:[%s220] sm:$0xff]
      %v229 = vld [vmem:[%s220 + $0x8] sm:$0xff]
      %v230 = vld [vmem:[%s220 + $0x10] sm:$0xff]
      %v231 = vld [vmem:[%s220 + $0x18] sm:$0xff]
      %v232 = vld [vmem:[%s220 + $0x20] sm:$0xff]
      %v233 = vld [vmem:[%s220 + $0x28] sm:$0xff]
      %v234 = vld [vmem:[%s220 + $0x30] sm:$0xff]
      %v235 = vld [vmem:[%s220 + $0x38] sm:$0xff]
      %v236 = vld [vmem:[%s220 + $0x40] sm:$0xff]
      %v237 = vld [vmem:[%s220 + $0x48] sm:$0xff]
      %v238 = vld [vmem:[%s220 + $0x50] sm:$0xff]
      %v239 = vld [vmem:[%s220 + $0x58] sm:$0xff]
      %v240 = vld [vmem:[%s220 + $0x60] sm:$0xff]
      %v241 = vld [vmem:[%s220 + $0x68] sm:$0xff]
      %v242 = vld [vmem:[%s220 + $0x70] sm:$0xff]
      %v243 = vld [vmem:[%s220 + $0x78] sm:$0xff]
      %v244 = vld [vmem:[%s1] sm:$0xff]
      %v245 = vld [vmem:[%s1 + $0x8] sm:$0xff]
      %v246 = vld [vmem:[%s2] sm:$0x1]
      %v248 = vlaneseq
      %v249 = vshrl.u32 %v248, 7
      %v250 = vsub.s32 0, %v249
      %v251 = vrot.slane %v246, %v250
      %vm253 = vcmask 130048
      %v255 = vsel %vm253, %v228, 0
      %v258 = vsel %vm253, %v229, 0
      %v261 = vsel %vm253, %v230, 0
      %v264 = vsel %vm253, %v231, 0
      %v267 = vsel %vm253, %v232, 0
      %v270 = vsel %vm253, %v233, 0
      %v273 = vsel %vm253, %v234, 0
      %v276 = vsel %vm253, %v235, 0
      %v279 = vsel %vm253, %v236, 0
      %v282 = vsel %vm253, %v237, 0
      %v285 = vsel %vm253, %v238, 0
      %v288 = vsel %vm253, %v239, 0
      %v291 = vsel %vm253, %v240, 0
      %v294 = vsel %vm253, %v241, 0
      %v297 = vsel %vm253, %v242, 0
      %v300 = vsel %vm253, %v243, 0
      %302 = vmatprep.subr.mxu0 0.0
      %303 = vmatpush1.msra.mxu0 %v244
      %304 = vmatprep.subr.mxu0 0.0
      %305 = vmatpush1.msra.mxu0 %v245
      %306 = vmatprep.subr.mxu0 0.0
      %307 = vmatpush1.msra.mxu0 0.0
      %308 = vmatprep.subr.mxu0 0.0
      %309 = vmatpush1.msra.mxu0 0.0
      %310 = vmatprep.subr.mxu0 0.0
      %311 = vmatpush1.msra.mxu0 0.0
      %312 = vmatprep.subr.mxu0 0.0
      %313 = vmatpush1.msra.mxu0 0.0
      %314 = vmatprep.subr.mxu0 0.0
      %315 = vmatpush1.msra.mxu0 0.0
      %316 = vmatprep.subr.mxu0 0.0
      %317 = vmatpush1.msra.mxu0 0.0
      %318 = vmatprep.subr.mxu0 0.0
      %319 = vmatpush1.msra.mxu0 0.0
      %320 = vmatprep.subr.mxu0 0.0
      %321 = vmatpush1.msra.mxu0 0.0
      %322 = vmatprep.subr.mxu0 0.0
      %323 = vmatpush1.msra.mxu0 0.0
      %324 = vmatprep.subr.mxu0 0.0
      %325 = vmatpush1.msra.mxu0 0.0
      %326 = vmatprep.subr.mxu0 0.0
      %327 = vmatpush1.msra.mxu0 0.0
      %328 = vmatprep.subr.mxu0 0.0
      %329 = vmatpush1.msra.mxu0 0.0
      %330 = vmatprep.subr.mxu0 0.0
      %331 = vmatpush1.msra.mxu0 0.0
      %332 = vmatprep.subr.mxu0 0.0
      %333 = vmatpush1.msra.mxu0 0.0
      %334 = vmatprep.subr.mxu0 0.0
      %335 = vmatpush1.msra.mxu0 0.0
      %336 = vmatprep.subr.mxu0 0.0
      %337 = vmatpush1.msra.mxu0 0.0
      %338 = vmatprep.subr.mxu0 0.0
      %339 = vmatpush1.msra.mxu0 0.0
      %340 = vmatprep.subr.mxu0 0.0
      %341 = vmatpush1.msra.mxu0 0.0
      %342 = vmatprep.subr.mxu0 0.0
      %343 = vmatpush1.msra.mxu0 0.0
      %344 = vmatprep.subr.mxu0 0.0
      %345 = vmatpush1.msra.mxu0 0.0
      %346 = vmatprep.subr.mxu0 0.0
      %347 = vmatpush1.msra.mxu0 0.0
      %348 = vmatprep.subr.mxu0 0.0
      %349 = vmatpush1.msra.mxu0 0.0
      %350 = vmatprep.subr.mxu0 0.0
      %351 = vmatpush1.msra.mxu0 0.0
      %352 = vmatprep.subr.mxu0 0.0
      %353 = vmatpush1.msra.mxu0 0.0
      %354 = vmatprep.subr.mxu0 0.0
      %355 = vmatpush1.msra.mxu0 0.0
      %356 = vmatprep.subr.mxu0 0.0
      %357 = vmatpush1.msra.mxu0 0.0
      %358 = vmatprep.subr.mxu0 0.0
      %359 = vmatpush1.msra.mxu0 0.0
      %360 = vmatprep.subr.mxu0 0.0
      %361 = vmatpush1.msra.mxu0 0.0
      %362 = vmatprep.subr.mxu0 0.0
      %363 = vmatpush1.msra.mxu0 0.0
      %364 = vmatprep.subr.mxu0 0.0
      %365 = vmatpush1.msra.mxu0 0.0
      %366 = vmatprep.mubr.f32.mxu0 0.0
      %367 = vmatmul.mubr.f32.gmra.mrb[0].mxu0 %v255
      %v368 = vpop.f32.mrb[0].mxu0
      %v369 = vadd.f32 %v251, %v368
      %v370 = vpop.f32.mrb[0].mxu0
      %371 = vmatprep.mubr.f32.mxu0 0.0
      %372 = vmatmul.mubr.f32.gmra.mrb[0].mxu0 %v258
      %v373 = vpop.f32.mrb[0].mxu0
      %v374 = vadd.f32 %v251, %v373
      %v375 = vpop.f32.mrb[0].mxu0
      %376 = vmatprep.mubr.f32.mxu0 0.0
      %377 = vmatmul.mubr.f32.gmra.mrb[0].mxu0 %v261
      %v378 = vpop.f32.mrb[0].mxu0
      %v379 = vadd.f32 %v251, %v378
      %v380 = vpop.f32.mrb[0].mxu0
      %381 = vmatprep.mubr.f32.mxu0 0.0
      %382 = vmatmul.mubr.f32.gmra.mrb[0].mxu0 %v264
      %v383 = vpop.f32.mrb[0].mxu0
      %v384 = vadd.f32 %v251, %v383
      %v385 = vpop.f32.mrb[0].mxu0
      %386 = vmatprep.mubr.f32.mxu0 0.0
      %387 = vmatmul.mubr.f32.gmra.mrb[0].mxu0 %v267
      %v388 = vpop.f32.mrb[0].mxu0
      %v389 = vadd.f32 %v251, %v388
      %v390 = vpop.f32.mrb[0].mxu0
      %391 = vmatprep.mubr.f32.mxu0 0.0
      %392 = vmatmul.mubr.f32.gmra.mrb[0].mxu0 %v270
      %v393 = vpop.f32.mrb[0].mxu0
      %v394 = vadd.f32 %v251, %v393
      %v395 = vpop.f32.mrb[0].mxu0
      %396 = vmatprep.mubr.f32.mxu0 0.0
      %397 = vmatmul.mubr.f32.gmra.mrb[0].mxu0 %v273
      %v398 = vpop.f32.mrb[0].mxu0
      %v399 = vadd.f32 %v251, %v398
      %v400 = vpop.f32.mrb[0].mxu0
      %401 = vmatprep.mubr.f32.mxu0 0.0
      %402 = vmatmul.mubr.f32.gmra.mrb[0].mxu0 %v276
      %v403 = vpop.f32.mrb[0].mxu0
      %v404 = vadd.f32 %v251, %v403
      %v405 = vpop.f32.mrb[0].mxu0
      %406 = vmatprep.mubr.f32.mxu0 0.0
      %407 = vmatmul.mubr.f32.gmra.mrb[0].mxu0 %v279
      %v408 = vpop.f32.mrb[0].mxu0
      %v409 = vadd.f32 %v251, %v408
      %v410 = vpop.f32.mrb[0].mxu0
      %411 = vmatprep.mubr.f32.mxu0 0.0
      %412 = vmatmul.mubr.f32.gmra.mrb[0].mxu0 %v282
      %v413 = vpop.f32.mrb[0].mxu0
      %v414 = vadd.f32 %v251, %v413
      %v415 = vpop.f32.mrb[0].mxu0
      %416 = vmatprep.mubr.f32.mxu0 0.0
      %417 = vmatmul.mubr.f32.gmra.mrb[0].mxu0 %v285
      %v418 = vpop.f32.mrb[0].mxu0
      %v419 = vadd.f32 %v251, %v418
      %v420 = vpop.f32.mrb[0].mxu0
      %421 = vmatprep.mubr.f32.mxu0 0.0
      %422 = vmatmul.mubr.f32.gmra.mrb[0].mxu0 %v288
      %v423 = vpop.f32.mrb[0].mxu0
      %v424 = vadd.f32 %v251, %v423
      %v425 = vpop.f32.mrb[0].mxu0
      %426 = vmatprep.mubr.f32.mxu0 0.0
      %427 = vmatmul.mubr.f32.gmra.mrb[0].mxu0 %v291
      %v428 = vpop.f32.mrb[0].mxu0
      %v429 = vadd.f32 %v251, %v428
      %v430 = vpop.f32.mrb[0].mxu0
      %431 = vmatprep.mubr.f32.mxu0 0.0
      %432 = vmatmul.mubr.f32.gmra.mrb[0].mxu0 %v294
      %v433 = vpop.f32.mrb[0].mxu0
      %v434 = vadd.f32 %v251, %v433
      %v435 = vpop.f32.mrb[0].mxu0
      %436 = vmatprep.mubr.f32.mxu0 0.0
      %437 = vmatmul.mubr.f32.gmra.mrb[0].mxu0 %v297
      %v438 = vpop.f32.mrb[0].mxu0
      %v439 = vadd.f32 %v251, %v438
      %v440 = vpop.f32.mrb[0].mxu0
      %441 = vmatprep.mubr.f32.mxu0 0.0
      %442 = vmatmul.mubr.f32.gmra.mrb[0].mxu0 %v300
      %v443 = vpop.f32.mrb[0].mxu0
      %v444 = vadd.f32 %v251, %v443
      %v445 = vpop.f32.mrb[0].mxu0
      %446 = vdwg.mxu0
      %v447 = vmax.f32 %v369, 0.0
      %v448 = vmax.f32 %v374, 0.0
      %v449 = vmax.f32 %v379, 0.0
      %v450 = vmax.f32 %v384, 0.0
      %v451 = vmax.f32 %v389, 0.0
      %v452 = vmax.f32 %v394, 0.0
      %v453 = vmax.f32 %v399, 0.0
      %v454 = vmax.f32 %v404, 0.0
      %v455 = vmax.f32 %v409, 0.0
      %v456 = vmax.f32 %v414, 0.0
      %v457 = vmax.f32 %v419, 0.0
      %v458 = vmax.f32 %v424, 0.0
      %v459 = vmax.f32 %v429, 0.0
      %v460 = vmax.f32 %v434, 0.0
      %v461 = vmax.f32 %v439, 0.0
      %v462 = vmax.f32 %v444, 0.0
      %v463 = vld [vmem:[%s3] sm:$0xff]
      %v464 = vld [vmem:[%s3 + $0x8] sm:$0xff]
      %v465 = vld [vmem:[%s3 + $0x10] sm:$0xff]
      %v466 = vld [vmem:[%s3 + $0x18] sm:$0xff]
      %v467 = vld [vmem:[%s3 + $0x20] sm:$0xff]
      %v468 = vld [vmem:[%s3 + $0x28] sm:$0xff]
      %v469 = vld [vmem:[%s3 + $0x30] sm:$0xff]
      %v470 = vld [vmem:[%s3 + $0x38] sm:$0xff]
      %v471 = vld [vmem:[%s3 + $0x40] sm:$0xff]
      %v472 = vld [vmem:[%s3 + $0x48] sm:$0xff]
      %v473 = vld [vmem:[%s3 + $0x50] sm:$0xff]
      %v474 = vld [vmem:[%s3 + $0x58] sm:$0xff]
      %v475 = vld [vmem:[%s3 + $0x60] sm:$0xff]
      %v476 = vld [vmem:[%s3 + $0x68] sm:$0xff]
      %v477 = vld [vmem:[%s3 + $0x70] sm:$0xff]
      %v478 = vld [vmem:[%s3 + $0x78] sm:$0xff]
      %v479 = vld [vmem:[%s4] sm:$0x1]
      %v481 = vlaneseq
      %v482 = vshrl.u32 %v481, 7
      %v483 = vsub.s32 0, %v482
      %v484 = vrot.slane %v479, %v483
      %486 = vmatprep.subr.mxu0 0.0
      %487 = vmatpush1.msra.mxu0 %v463
      %488 = vmatprep.subr.mxu0 0.0
      %489 = vmatpush1.msra.mxu0 %v464
      %490 = vmatprep.subr.mxu0 0.0
      %491 = vmatpush1.msra.mxu0 %v465
      %492 = vmatprep.subr.mxu0 0.0
      %493 = vmatpush1.msra.mxu0 %v466
      %494 = vmatprep.subr.mxu0 0.0
      %495 = vmatpush1.msra.mxu0 %v467
      %496 = vmatprep.subr.mxu0 0.0
      %497 = vmatpush1.msra.mxu0 %v468
      %498 = vmatprep.subr.mxu0 0.0
      %499 = vmatpush1.msra.mxu0 %v469
      %500 = vmatprep.subr.mxu0 0.0
      %501 = vmatpush1.msra.mxu0 %v470
      %502 = vmatprep.subr.mxu0 0.0
      %503 = vmatpush1.msra.mxu0 %v471
      %504 = vmatprep.subr.mxu0 0.0
      %505 = vmatpush1.msra.mxu0 %v472
      %506 = vmatprep.subr.mxu0 0.0
      %507 = vmatpush1.msra.mxu0 %v473
      %508 = vmatprep.subr.mxu0 0.0
      %509 = vmatpush1.msra.mxu0 %v474
      %510 = vmatprep.subr.mxu0 0.0
      %511 = vmatpush1.msra.mxu0 %v475
      %512 = vmatprep.subr.mxu0 0.0
      %513 = vmatpush1.msra.mxu0 %v476
      %514 = vmatprep.subr.mxu0 0.0
      %515 = vmatpush1.msra.mxu0 %v477
      %516 = vmatprep.subr.mxu0 0.0
      %517 = vmatpush1.msra.mxu0 %v478
      %518 = vmatprep.subr.mxu0 0.0
      %519 = vmatpush1.msra.mxu0 0.0
      %520 = vmatprep.subr.mxu0 0.0
      %521 = vmatpush1.msra.mxu0 0.0
      %522 = vmatprep.subr.mxu0 0.0
      %523 = vmatpush1.msra.mxu0 0.0
      %524 = vmatprep.subr.mxu0 0.0
      %525 = vmatpush1.msra.mxu0 0.0
      %526 = vmatprep.subr.mxu0 0.0
      %527 = vmatpush1.msra.mxu0 0.0
      %528 = vmatprep.subr.mxu0 0.0
      %529 = vmatpush1.msra.mxu0 0.0
      %530 = vmatprep.subr.mxu0 0.0
      %531 = vmatpush1.msra.mxu0 0.0
      %532 = vmatprep.subr.mxu0 0.0
      %533 = vmatpush1.msra.mxu0 0.0
      %534 = vmatprep.subr.mxu0 0.0
      %535 = vmatpush1.msra.mxu0 0.0
      %536 = vmatprep.subr.mxu0 0.0
      %537 = vmatpush1.msra.mxu0 0.0
      %538 = vmatprep.subr.mxu0 0.0
      %539 = vmatpush1.msra.mxu0 0.0
      %540 = vmatprep.subr.mxu0 0.0
      %541 = vmatpush1.msra.mxu0 0.0
      %542 = vmatprep.subr.mxu0 0.0
      %543 = vmatpush1.msra.mxu0 0.0
      %544 = vmatprep.subr.mxu0 0.0
      %545 = vmatpush1.msra.mxu0 0.0
      %546 = vmatprep.subr.mxu0 0.0
      %547 = vmatpush1.msra.mxu0 0.0
      %548 = vmatprep.subr.mxu0 0.0
      %549 = vmatpush1.msra.mxu0 0.0
      %550 = vmatprep.mubr.f32.mxu0 0.0
      %551 = vmatmul.mubr.f32.gmra.mrb[0].mxu0 %v447
      %v552 = vpop.f32.mrb[0].mxu0
      %v553 = vadd.f32 %v484, %v552
      %v554 = vpop.f32.mrb[0].mxu0
      %555 = vmatprep.mubr.f32.mxu0 0.0
      %556 = vmatmul.mubr.f32.gmra.mrb[0].mxu0 %v448
      %v557 = vpop.f32.mrb[0].mxu0
      %v558 = vadd.f32 %v484, %v557
      %v559 = vpop.f32.mrb[0].mxu0
      %560 = vmatprep.mubr.f32.mxu0 0.0
      %561 = vmatmul.mubr.f32.gmra.mrb[0].mxu0 %v449
      %v562 = vpop.f32.mrb[0].mxu0
      %v563 = vadd.f32 %v484, %v562
      %v564 = vpop.f32.mrb[0].mxu0
      %565 = vmatprep.mubr.f32.mxu0 0.0
      %566 = vmatmul.mubr.f32.gmra.mrb[0].mxu0 %v450
      %v567 = vpop.f32.mrb[0].mxu0
      %v568 = vadd.f32 %v484, %v567
      %v569 = vpop.f32.mrb[0].mxu0
      %570 = vmatprep.mubr.f32.mxu0 0.0
      %571 = vmatmul.mubr.f32.gmra.mrb[0].mxu0 %v451
      %v572 = vpop.f32.mrb[0].mxu0
      %v573 = vadd.f32 %v484, %v572
      %v574 = vpop.f32.mrb[0].mxu0
      %575 = vmatprep.mubr.f32.mxu0 0.0
      %576 = vmatmul.mubr.f32.gmra.mrb[0].mxu0 %v452
      %v577 = vpop.f32.mrb[0].mxu0
      %v578 = vadd.f32 %v484, %v577
      %v579 = vpop.f32.mrb[0].mxu0
      %580 = vmatprep.mubr.f32.mxu0 0.0
      %581 = vmatmul.mubr.f32.gmra.mrb[0].mxu0 %v453
      %v582 = vpop.f32.mrb[0].mxu0
      %v583 = vadd.f32 %v484, %v582
      %v584 = vpop.f32.mrb[0].mxu0
      %585 = vmatprep.mubr.f32.mxu0 0.0
      %586 = vmatmul.mubr.f32.gmra.mrb[0].mxu0 %v454
      %v587 = vpop.f32.mrb[0].mxu0
      %v588 = vadd.f32 %v484, %v587
      %v589 = vpop.f32.mrb[0].mxu0
      %590 = vmatprep.mubr.f32.mxu0 0.0
      %591 = vmatmul.mubr.f32.gmra.mrb[0].mxu0 %v455
      %v592 = vpop.f32.mrb[0].mxu0
      %v593 = vadd.f32 %v484, %v592
      %v594 = vpop.f32.mrb[0].mxu0
      %595 = vmatprep.mubr.f32.mxu0 0.0
      %596 = vmatmul.mubr.f32.gmra.mrb[0].mxu0 %v456
      %v597 = vpop.f32.mrb[0].mxu0
      %v598 = vadd.f32 %v484, %v597
      %v599 = vpop.f32.mrb[0].mxu0
      %600 = vmatprep.mubr.f32.mxu0 0.0
      %601 = vmatmul.mubr.f32.gmra.mrb[0].mxu0 %v457
      %v602 = vpop.f32.mrb[0].mxu0
      %v603 = vadd.f32 %v484, %v602
      %v604 = vpop.f32.mrb[0].mxu0
      %605 = vmatprep.mubr.f32.mxu0 0.0
      %606 = vmatmul.mubr.f32.gmra.mrb[0].mxu0 %v458
      %v607 = vpop.f32.mrb[0].mxu0
      %v608 = vadd.f32 %v484, %v607
      %v609 = vpop.f32.mrb[0].mxu0
      %610 = vmatprep.mubr.f32.mxu0 0.0
      %611 = vmatmul.mubr.f32.gmra.mrb[0].mxu0 %v459
      %v612 = vpop.f32.mrb[0].mxu0
      %v613 = vadd.f32 %v484, %v612
      %v614 = vpop.f32.mrb[0].mxu0
      %615 = vmatprep.mubr.f32.mxu0 0.0
      %616 = vmatmul.mubr.f32.gmra.mrb[0].mxu0 %v460
      %v617 = vpop.f32.mrb[0].mxu0
      %v618 = vadd.f32 %v484, %v617
      %v619 = vpop.f32.mrb[0].mxu0
      %620 = vmatprep.mubr.f32.mxu0 0.0
      %621 = vmatmul.mubr.f32.gmra.mrb[0].mxu0 %v461
      %v622 = vpop.f32.mrb[0].mxu0
      %v623 = vadd.f32 %v484, %v622
      %v624 = vpop.f32.mrb[0].mxu0
      %625 = vmatprep.mubr.f32.mxu0 0.0
      %626 = vmatmul.mubr.f32.gmra.mrb[0].mxu0 %v462
      %v627 = vpop.f32.mrb[0].mxu0
      %v628 = vadd.f32 %v484, %v627
      %v629 = vpop.f32.mrb[0].mxu0
      %630 = vdwg.mxu0
      %vm631 = vcmask 31744
      %632 = vst.msk [vmem:[%s226] sm:$0xff] %vm631, %v553
      %633 = vst.msk [vmem:[%s226 + $0x8] sm:$0xff] %vm631, %v558
      %634 = vst.msk [vmem:[%s226 + $0x10] sm:$0xff] %vm631, %v563
      %635 = vst.msk [vmem:[%s226 + $0x18] sm:$0xff] %vm631, %v568
      %636 = vst.msk [vmem:[%s226 + $0x20] sm:$0xff] %vm631, %v573
      %637 = vst.msk [vmem:[%s226 + $0x28] sm:$0xff] %vm631, %v578
      %638 = vst.msk [vmem:[%s226 + $0x30] sm:$0xff] %vm631, %v583
      %639 = vst.msk [vmem:[%s226 + $0x38] sm:$0xff] %vm631, %v588
      %640 = vst.msk [vmem:[%s226 + $0x40] sm:$0xff] %vm631, %v593
      %641 = vst.msk [vmem:[%s226 + $0x48] sm:$0xff] %vm631, %v598
      %642 = vst.msk [vmem:[%s226 + $0x50] sm:$0xff] %vm631, %v603
      %643 = vst.msk [vmem:[%s226 + $0x58] sm:$0xff] %vm631, %v608
      %644 = vst.msk [vmem:[%s226 + $0x60] sm:$0xff] %vm631, %v613
      %645 = vst.msk [vmem:[%s226 + $0x68] sm:$0xff] %vm631, %v618
      %646 = vst.msk [vmem:[%s226 + $0x70] sm:$0xff] %vm631, %v623
      %647 = vst.msk [vmem:[%s226 + $0x78] sm:$0xff] %vm631, %v628
      %s648 = smul.u32 16, %s16
      %p649 = scmp.lt.s32.totalorder %s648, 31
      %s650 = scalar_select %p649, %s648, 31
      %s651 = smul.addr %s650, 8
      %s652 = scalar_lea.vmem %s5, %s651
      // Predicated region
      $region41: #{tpu_custom_call.1} parent=39 // pred_check
        %p653 = pneg %p144
      $region42: #{tpu_custom_call.1} parent=39 // pred_check_branch
        %655 = sbr.rel (%p653) target = $region44
      $region43: #{tpu_custom_call.1} parent=39 // pred_region
        %s656 = smul.u32 16, %s16
      $region44: #{tpu_custom_call.1} parent=39 // pred_fallthru
        _
    $region40: #{tpu_custom_call.1} parent=5 // pred_fallthru
      _
    %p657 = scmp.le.s32.totalorder 2, %s11
    // Predicated region
    $region45: #{tpu_custom_call.1} parent=5 // pred_check
      %p658 = pneg %p657
    $region46: #{tpu_custom_call.1} parent=5 // pred_check_branch
      %660 = sbr.rel (%p658) target = $region48
    $region47: #{tpu_custom_call.1} parent=5 // pred_region
      %s661 = ssub.s32 %s11, 2
      // Predicated region
      $region49: #{tpu_custom_call.1} parent=47 // pred_check
        %p662 = pneg %p150
      $region50: #{tpu_custom_call.1} parent=47 // pred_check_branch
        %664 = sbr.rel (%p662) target = $region52
      $region51: #{tpu_custom_call.1} parent=47 // pred_region
        %s665 = smul.u32 16, %s17
        %p666 = scmp.lt.s32.totalorder %s665, 31
        %s667 = scalar_select %p666, %s665, 31
        %s668 = smul.addr %s667, 8
        %s669 = scalar_lea.vmem %s5, %s668
      $region52: #{tpu_custom_call.1} parent=47 // pred_fallthru
        _
    $region48: #{tpu_custom_call.1} parent=5 // pred_fallthru
      _
  $region6: #{tpu_custom_call.1} parent=0 // loop_footer
    %s15 = sadd.s32 1, %s11
  $region7: #{tpu_custom_call.1} parent=0 // loop_footer_branch
    %10 = sbr.rel target = $region3
  $region8: #{tpu_custom_call.1} parent=0 // loop_exit
    _

</llo_original>
